<compile_context>
chip_gen: v7x
topology: tpu7x:2x2x1
jax: 0.10.0
libtpu: 0.0.40
codegen_flags: <defaults>
</compile_context>

<pallas_src>
import functools
import numpy as np
import jax
import jax.numpy as jnp
from jax import lax
from jax.experimental import pallas as pl
from jax.experimental.pallas import tpu as pltpu

START_TAG = "<START>"
STOP_TAG = "<STOP>"

OUT_W = 128     # lane-dense packed output width
PAD = 8         # sublane-aligned bias block inside the parameter slabs


# ----------------------------------------------------------------------------
# Fused kernel: one-hot gather+projection -> packed BiLSTM -> hidden2tag
#               -> Viterbi forward -> in-kernel backtracking.
# ----------------------------------------------------------------------------
def _bilstm_crf_kernel(sent_ref,                    # (T, 2) int32 [fwd idx, reversed idx]
                       a_ref,                       # (PAD+2H+2V, 8H) f32 [bias; Whh_block; EW_block]
                       b_ref,                       # (PAD+2H+K, K)  f32 [btag; WtagT; transitions]
                       hc_ref,                      # (2, 2H) f32 row0=[hf0||hb0], row1=[cf0||cb0]
                       out_ref,                     # (1, OUT_W) int32 packed output
                       gxs_ref, hs_ref, feats_ref, bptrs_ref,
                       *, start_idx, stop_idx, V, H, K, T):
    H2, H4, H6, H8 = 2 * H, 4 * H, 6 * H, 8 * H
    V2 = 2 * V

    # ---- parameter slab views (static, sublane-aligned slices) -------------
    bias = a_ref[0:1, :]                            # (1, 8H)
    whh_block = a_ref[PAD:PAD + H2, :]              # (2H, 8H) block-diag recurrent weights
    ew_block = a_ref[PAD + H2:PAD + H2 + V2, :]     # (2V, 8H) emb_table @ W_ih (both dirs)

    btag = b_ref[0:1, :]                            # (1, K)
    wtag_f = b_ref[PAD:PAD + H, :]                  # (H, K)
    wtag_b = b_ref[PAD + H:PAD + H2, :]             # (H, K)
    trans = b_ref[PAD + H2:PAD + H2 + K, :]         # (K, K), trans[next, prev]

    # ---- 1) one-hot gather fused with the input projection of BOTH dirs ----
    sent2 = sent_ref[...]                           # (T, 2) int32
    lane_v = lax.broadcasted_iota(jnp.int32, (T, V2), 1)
    target = jnp.where(lane_v < V, sent2[:, 0:1], sent2[:, 1:2] + V)
    onehot = (lane_v == target).astype(jnp.float32)                       # (T, 2V)
    gxs_ref[...] = (jnp.dot(onehot, ew_block,
                            preferred_element_type=jnp.float32) + bias)   # (T, 8H)

    # ---- 2) merged fwd/bwd recurrence: packed (1,2H) carry, one dot/step ----
    # gate layout per row: [i_f i_b | f_f f_b | o_f o_b | g_f g_b]
    def step(s, carry):
        h, c = carry                                                      # (1, 2H) each
        g = gxs_ref[pl.ds(s, 1), :] + jnp.dot(h, whh_block,
                                              preferred_element_type=jnp.float32)
        sig = jax.nn.sigmoid(g[:, 0:H6])            # i, f, o gates (both dirs)
        gt = jnp.tanh(g[:, H6:H8])                  # g gate (both dirs)
        c = sig[:, H2:H4] * c + sig[:, 0:H2] * gt
        h = sig[:, H4:H6] * jnp.tanh(c)
        hs_ref[pl.ds(s, 1), :] = h                  # row s = [hf(s) || hb(T-1-s)]
        return h, c

    # NOTE: full unroll is appropriate only for small T.
    lax.fori_loop(0, T, step, (hc_ref[0:1, :], hc_ref[1:2, :]), unroll=True)

    # ---- 3) hidden2tag: realign backward half in time with a flip matmul ----
    hs = hs_ref[...]                                                      # (T, 2H)
    r_i = lax.broadcasted_iota(jnp.int32, (T, T), 0)
    c_i = lax.broadcasted_iota(jnp.int32, (T, T), 1)
    rev = (r_i + c_i == T - 1).astype(jnp.float32)                        # (T, T) flip
    hb = jnp.dot(rev, hs[:, H:H2], preferred_element_type=jnp.float32)    # hb(t), time-aligned
    feats_ref[...] = (jnp.dot(hs[:, 0:H], wtag_f, preferred_element_type=jnp.float32)
                      + jnp.dot(hb, wtag_b, preferred_element_type=jnp.float32)
                      + btag)                                             # (T, K)

    # ---- 4) Viterbi forward recursion (backpointers stay in VMEM) ----------
    lane_k = lax.broadcasted_iota(jnp.int32, (1, K), 1)
    init_fv = jnp.where(lane_k == start_idx, jnp.float32(0.0), jnp.float32(-10000.0))

    def vit_body(t, fv):                            # fv: (1, K)
        ntv = fv + trans                            # ntv[next, prev] = fv[prev] + trans[next, prev]
        bptrs_ref[pl.ds(t, 1), :] = jnp.argmax(ntv, axis=1).astype(jnp.int32).reshape(1, K)
        return jnp.max(ntv, axis=1).reshape(1, K) + feats_ref[pl.ds(t, 1), :]

    fv = lax.fori_loop(0, T, vit_body, init_fv, unroll=True)
    term = fv + trans[stop_idx:stop_idx + 1, :]     # (1, K)

    # ---- 5) in-kernel backtracking into a single lane-dense output ---------
    m = jnp.max(term)                                                     # best score
    best0 = jnp.min(jnp.where(term == m, lane_k, K)).astype(jnp.int32)    # first argmax
    out_lane = lax.broadcasted_iota(jnp.int32, (1, OUT_W), 1)
    path0 = jnp.where(out_lane == T - 1, best0, 0).astype(jnp.int32)

    def bt_body(s, carry):
        best, path = carry
        t = T - 1 - s                               # t: T-1 .. 0
        row = bptrs_ref[pl.ds(t, 1), :]             # (1, K) int32
        prev = jnp.sum(jnp.where(lane_k == best, row, 0)).astype(jnp.int32)
        path = jnp.where(out_lane == t - 1, prev, path)   # no-op at t == 0
        return prev, path

    start_tag, path = lax.fori_loop(0, T, bt_body, (best0, path0), unroll=True)

    score_bits = pltpu.bitcast(jnp.full((1, OUT_W), m, dtype=jnp.float32), jnp.int32)
    out = jnp.where(out_lane == OUT_W - 2, start_tag, path)
    out = jnp.where(out_lane == OUT_W - 1, score_bits, out)
    out_ref[...] = out


# ----------------------------------------------------------------------------
# Host wrapper
# ----------------------------------------------------------------------------
def _cost_estimate(T, V, H, K):
    flops = (2 * T * 2 * V * 8 * H          # one-hot gather + input projection
             + 2 * T * 2 * H * 8 * H        # block-diagonal recurrent matmuls
             + 2 * T * T * H                # time flip
             + 2 * T * 2 * H * K            # hidden2tag
             + 4 * T * K * K)               # Viterbi add/max/argmax
    transcendentals = 10 * T * H
    bytes_accessed = 4 * ((PAD + 2 * H + 2 * V) * 8 * H
                          + (PAD + 2 * H + K) * K
                          + 2 * 2 * H + 2 * T + OUT_W)
    return pl.CostEstimate(flops=flops, transcendentals=transcendentals,
                           bytes_accessed=bytes_accessed)


def bilstm_crf_forward(sentence, params, tag_to_ix):
    T = int(sentence.shape[0])
    V, H, K = params["V"], params["H"], params["K"]
    assert T <= OUT_W - 2

    sent = sentence.astype(jnp.int32)
    sent2 = jnp.stack([sent, sent[::-1]], axis=1)                 # (T, 2)

    kernel = functools.partial(_bilstm_crf_kernel,
                               start_idx=tag_to_ix[START_TAG],
                               stop_idx=tag_to_ix[STOP_TAG],
                               V=V, H=H, K=K, T=T)
    vmem = pl.BlockSpec(memory_space=pltpu.MemorySpace.VMEM)

    out = pl.pallas_call(
        kernel,
        out_shape=jax.ShapeDtypeStruct((1, OUT_W), jnp.int32),
        in_specs=[vmem, vmem, vmem, vmem],
        out_specs=vmem,
        scratch_shapes=[pltpu.VMEM((T, 8 * H), jnp.float32),      # step-aligned x-gates
                        pltpu.VMEM((T, 2 * H), jnp.float32),      # packed hidden states
                        pltpu.VMEM((T, K), jnp.float32),          # feats
                        pltpu.VMEM((T, K), jnp.int32)],           # backpointers
        cost_estimate=_cost_estimate(T, V, H, K),
    )(sent2, params["slab_a"], params["slab_b"], params["h0c0"])

    out_np = np.asarray(jax.block_until_ready(out))
    best_path = [int(x) for x in out_np[0, :T]]
    start_tag = int(out_np[0, OUT_W - 2])
    path_score = float(out_np[0, OUT_W - 1:OUT_W].copy().view(np.float32)[0])
    assert start_tag == tag_to_ix[START_TAG]
    return path_score, best_path


# ----------------------------------------------------------------------------
# Deterministic parameter construction (mirrors the PyTorch module shapes)
# plus host-side packing into the fused-kernel layouts.
# ----------------------------------------------------------------------------
def make_params(key, vocab_size, embedding_dim, hidden_dim, tag_to_ix):
    K = len(tag_to_ix)
    H = hidden_dim // 2          # per-direction LSTM hidden size
    E = embedding_dim
    V = vocab_size
    ks = jax.random.split(key, 16)
    s = 1.0 / np.sqrt(H)

    def unif(k, shape):
        return jax.random.uniform(k, shape, jnp.float32, -s, s)

    # nn.Embedding: N(0, 1)
    emb_table = jax.random.normal(ks[0], (V, E), jnp.float32)

    # nn.LSTM(E, H, bidirectional=True): per direction W_ih (4H,E), W_hh (4H,H), biases (4H,)
    wih_f = unif(ks[1], (4 * H, E)); whh_f = unif(ks[2], (4 * H, H))
    bih_f = unif(ks[3], (4 * H,));   bhh_f = unif(ks[4], (4 * H,))
    wih_b = unif(ks[5], (4 * H, E)); whh_b = unif(ks[6], (4 * H, H))
    bih_b = unif(ks[7], (4 * H,));   bhh_b = unif(ks[8], (4 * H,))

    # nn.Linear(hidden_dim, K)
    sl = 1.0 / np.sqrt(hidden_dim)
    wtag = jax.random.uniform(ks[9], (K, 2 * H), jnp.float32, -sl, sl)
    btag = jax.random.uniform(ks[10], (K,), jnp.float32, -sl, sl)

    # transitions[next, prev]; START row and STOP column blocked
    transitions = jax.random.normal(ks[11], (K, K), jnp.float32)
    transitions = transitions.at[tag_to_ix[START_TAG], :].set(-10000.0)
    transitions = transitions.at[:, tag_to_ix[STOP_TAG]].set(-10000.0)

    # init_hidden(): randn(2, 1, H) for h0/c0 (row0=fwd, row1=bwd)
    h0 = jax.random.normal(ks[12], (2, H), jnp.float32)
    c0 = jax.random.normal(ks[13], (2, H), jnp.float32)

    # ---- gate-major / direction-minor packing helpers ----------------------
    def split_gates(w4h):                     # torch gate order along last dim: i, f, g, o
        return (w4h[..., 0:H], w4h[..., H:2 * H], w4h[..., 2 * H:3 * H], w4h[..., 3 * H:4 * H])

    def pack_dir(w4h, direction):             # -> (..., 8H) in [i_f i_b|f_f f_b|o_f o_b|g_f g_b]
        i, f, g, o = split_gates(w4h)
        z = jnp.zeros_like(i)
        cols = [i, z, f, z, o, z, g, z] if direction == 0 else [z, i, z, f, z, o, z, g]
        return jnp.concatenate(cols, axis=-1)

    # block-diagonal recurrent weight (2H, 8H): rows 0:H feed fwd gates, rows H:2H bwd gates
    whh_block = jnp.concatenate([pack_dir(whh_f.T, 0), pack_dir(whh_b.T, 1)], axis=0)
    # embedding folded into the input projection: (2V, 8H)
    ew_block = jnp.concatenate([pack_dir(emb_table @ wih_f.T, 0),
                                pack_dir(emb_table @ wih_b.T, 1)], axis=0)
    # packed gate bias (1, 8H)
    bi_f, bf_f, bg_f, bo_f = split_gates(bih_f + bhh_f)
    bi_b, bf_b, bg_b, bo_b = split_gates(bih_b + bhh_b)
    b_all = jnp.concatenate([bi_f, bi_b, bf_f, bf_b, bo_f, bo_b, bg_f, bg_b]).reshape(1, 8 * H)

    # bundled parameter slabs (sublane-aligned sections)
    bias_pad = jnp.zeros((PAD, 8 * H), jnp.float32).at[0].set(b_all[0])
    slab_a = jnp.concatenate([bias_pad, whh_block, ew_block], axis=0)       # (PAD+2H+2V, 8H)

    btag_pad = jnp.zeros((PAD, K), jnp.float32).at[0].set(btag)
    slab_b = jnp.concatenate([btag_pad, wtag.T, transitions], axis=0)       # (PAD+2H+K, K)

    h0c0 = jnp.stack([jnp.concatenate([h0[0], h0[1]]),
                      jnp.concatenate([c0[0], c0[1]])], axis=0)             # (2, 2H)

    raw = dict(emb_table=emb_table, wih_f=wih_f, whh_f=whh_f, bih_f=bih_f, bhh_f=bhh_f,
               wih_b=wih_b, whh_b=whh_b, bih_b=bih_b, bhh_b=bhh_b,
               wtag=wtag, btag=btag, transitions=transitions, h0=h0, c0=c0)

    return {"slab_a": slab_a, "slab_b": slab_b, "h0c0": h0c0,
            "V": V, "H": H, "K": K, "raw": raw}


# ----------------------------------------------------------------------------
# Pure-numpy reference (unpacked weights) for a tolerant score check.
# ----------------------------------------------------------------------------
def _reference_forward(sentence, raw, tag_to_ix):
    f32 = np.float32
    sent = np.asarray(sentence, np.int64)
    emb = np.asarray(raw["emb_table"], f32)
    T = sent.shape[0]
    H = np.asarray(raw["whh_f"]).shape[1]
    K = np.asarray(raw["transitions"]).shape[0]

    def sigmoid(x):
        return 1.0 / (1.0 + np.exp(-x))

    def run_dir(wih, whh, bih, bhh, h, c, idxs):
        wih = np.asarray(wih, f32); whh = np.asarray(whh, f32)
        bih = np.asarray(bih, f32); bhh = np.asarray(bhh, f32)
        hs = {}
        for t in idxs:
            x = emb[sent[t]]
            g = x @ wih.T + bih + h @ whh.T + bhh
            i = sigmoid(g[0:H]); f = sigmoid(g[H:2 * H])
            gg = np.tanh(g[2 * H:3 * H]); o = sigmoid(g[3 * H:4 * H])
            c = f * c + i * gg
            h = o * np.tanh(c)
            hs[t] = h
        return hs

    h0 = np.asarray(raw["h0"], f32); c0 = np.asarray(raw["c0"], f32)
    hs_f = run_dir(raw["wih_f"], raw["whh_f"], raw["bih_f"], raw["bhh_f"],
                   h0[0].copy(), c0[0].copy(), range(T))
    hs_b = run_dir(raw["wih_b"], raw["whh_b"], raw["bih_b"], raw["bhh_b"],
                   h0[1].copy(), c0[1].copy(), range(T - 1, -1, -1))

    wtag = np.asarray(raw["wtag"], f32); btag = np.asarray(raw["btag"], f32)
    feats = np.stack([np.concatenate([hs_f[t], hs_b[t]]) @ wtag.T + btag for t in range(T)])

    trans = np.asarray(raw["transitions"], f32)
    start, stop = tag_to_ix[START_TAG], tag_to_ix[STOP_TAG]
    fv = np.full((K,), -10000.0, f32); fv[start] = 0.0
    bptrs = []
    for t in range(T):
        ntv = fv[None, :] + trans
        best = np.argmax(ntv, axis=1)
        bptrs.append(best)
        fv = ntv[np.arange(K), best] + feats[t]
    term = fv + trans[stop]
    best = int(np.argmax(term))
    score = float(term[best])
    path = [best]
    for bp in reversed(bptrs):
        best = int(bp[best])
        path.append(best)
    assert path.pop() == start
    path.reverse()
    return score, path


if __name__ == "__main__":
    tag_to_ix = {"B": 0, "I": 1, "O": 2, START_TAG: 3, STOP_TAG: 4}
    vocab_size = 32
    embedding_dim = 16
    hidden_dim = 32          # -> 16 per LSTM direction (8H == 128 lanes)
    seq_len = 8

    key = jax.random.PRNGKey(0)
    pkey, skey = jax.random.split(key)
    params = make_params(pkey, vocab_size, embedding_dim, hidden_dim, tag_to_ix)
    sentence = jax.random.randint(skey, (seq_len,), 0, vocab_size, dtype=jnp.int32)

    score, tag_seq = bilstm_crf_forward(sentence, params, tag_to_ix)

    # structural checks + tolerant score check against an unpacked numpy reference
    assert len(tag_seq) == seq_len
    assert all(0 <= t < len(tag_to_ix) for t in tag_seq)
    assert np.isfinite(score)
    ref_score, _ref_path = _reference_forward(np.asarray(sentence), params["raw"], tag_to_ix)
    assert abs(score - ref_score) < 0.5, (score, ref_score)

    print("KERNEL_OK")
</pallas_src>

<mosaic_0001>
module attributes {stable_mosaic.version = 11 : i64} {
  func.func @_bilstm_crf_kernel(%arg0: memref<8x2xi32, #tpu.memory_space<vmem>>, %arg1: memref<104x128xf32, #tpu.memory_space<vmem>>, %arg2: memref<45x5xf32, #tpu.memory_space<vmem>>, %arg3: memref<2x32xf32, #tpu.memory_space<vmem>>, %arg4: memref<1x128xi32, #tpu.memory_space<vmem>>, %arg5: memref<8x128xf32, #tpu.memory_space<vmem>>, %arg6: memref<8x32xf32, #tpu.memory_space<vmem>>, %arg7: memref<8x5xf32, #tpu.memory_space<vmem>>, %arg8: memref<8x5xi32, #tpu.memory_space<vmem>>) attributes {dimension_semantics = [], scalar_prefetch = 0 : i64, scratch_operands = 4 : i64, tpu.core_type = #tpu.core_type<tc>} {
    %c0 = arith.constant 0 : index
    %c0_0 = arith.constant 0 : index
    %0 = vector.load %arg1[%c0, %c0_0] : memref<104x128xf32, #tpu.memory_space<vmem>>, vector<1x128xf32>
    %c8 = arith.constant 8 : index
    %c0_1 = arith.constant 0 : index
    %1 = vector.load %arg1[%c8, %c0_1] : memref<104x128xf32, #tpu.memory_space<vmem>>, vector<32x128xf32>
    %c40 = arith.constant 40 : index
    %c0_2 = arith.constant 0 : index
    %2 = vector.load %arg1[%c40, %c0_2] : memref<104x128xf32, #tpu.memory_space<vmem>>, vector<64x128xf32>
    %c0_3 = arith.constant 0 : index
    %c0_4 = arith.constant 0 : index
    %3 = vector.load %arg2[%c0_3, %c0_4] : memref<45x5xf32, #tpu.memory_space<vmem>>, vector<1x5xf32>
    %c8_5 = arith.constant 8 : index
    %c0_6 = arith.constant 0 : index
    %4 = vector.load %arg2[%c8_5, %c0_6] : memref<45x5xf32, #tpu.memory_space<vmem>>, vector<16x5xf32>
    %c24 = arith.constant 24 : index
    %c0_7 = arith.constant 0 : index
    %5 = vector.load %arg2[%c24, %c0_7] : memref<45x5xf32, #tpu.memory_space<vmem>>, vector<16x5xf32>
    %c40_8 = arith.constant 40 : index
    %c0_9 = arith.constant 0 : index
    %6 = vector.load %arg2[%c40_8, %c0_9] : memref<45x5xf32, #tpu.memory_space<vmem>>, vector<5x5xf32>
    %c0_10 = arith.constant 0 : index
    %c0_11 = arith.constant 0 : index
    %7 = vector.load %arg0[%c0_10, %c0_11] : memref<8x2xi32, #tpu.memory_space<vmem>>, vector<8x2xi32>
    %8 = tpu.iota {dimensions = array<i32: 1>} : vector<8x64xi32>
    %c32_i32 = arith.constant 32 : i32
    %9 = vector.broadcast %c32_i32 : i32 to vector<8x64xi32>
    %10 = arith.cmpi slt, %8, %9 : vector<8x64xi32>
    %11 = vector.extract_strided_slice %7 {offsets = [0, 0], sizes = [8, 1], strides = [1, 1]} : vector<8x2xi32> to vector<8x1xi32>
    %12 = vector.extract_strided_slice %7 {offsets = [0, 1], sizes = [8, 1], strides = [1, 1]} : vector<8x2xi32> to vector<8x1xi32>
    %c32_i32_12 = arith.constant 32 : i32
    %13 = vector.broadcast %c32_i32_12 : i32 to vector<8x1xi32>
    %14 = arith.addi %12, %13 : vector<8x1xi32>
    %15 = vector.shape_cast %11 : vector<8x1xi32> to vector<8x1xi32>
    %16 = vector.broadcast %15 : vector<8x1xi32> to vector<8x64xi32>
    %17 = vector.shape_cast %14 : vector<8x1xi32> to vector<8x1xi32>
    %18 = vector.broadcast %17 : vector<8x1xi32> to vector<8x64xi32>
    %19 = arith.select %10, %16, %18 : vector<8x64xi1>, vector<8x64xi32>
    %20 = arith.cmpi eq, %8, %19 : vector<8x64xi32>
    %21 = arith.extui %20 : vector<8x64xi1> to vector<8x64xi32>
    %22 = arith.sitofp %21 : vector<8x64xi32> to vector<8x64xf32>
    %cst = arith.constant dense<0.000000e+00> : vector<8x128xf32>
    %23 = tpu.matmul %22, %2, %cst {dimension_numbers = #tpu.dot_dimension_numbers<[1], [0], [0], [1], [0, 0, 1, 1], [], []>} : vector<8x64xf32>, vector<64x128xf32>, vector<8x128xf32> -> vector<8x128xf32>
    %24 = vector.broadcast %0 : vector<1x128xf32> to vector<8x128xf32>
    %25 = arith.addf %23, %24 : vector<8x128xf32>
    %c0_13 = arith.constant 0 : index
    %c0_14 = arith.constant 0 : index
    %26 = vector.load %arg5[%c0_13, %c0_14] : memref<8x128xf32, #tpu.memory_space<vmem>>, vector<8x128xf32>
    tpu.vector_store %arg5[%c0_13, %c0_14], %25 {strides = array<i32>} : memref<8x128xf32, #tpu.memory_space<vmem>>, vector<8x128xf32>,
    %c0_15 = arith.constant 0 : index
    %c0_16 = arith.constant 0 : index
    %27 = vector.load %arg3[%c0_15, %c0_16] : memref<2x32xf32, #tpu.memory_space<vmem>>, vector<1x32xf32>
    %c1 = arith.constant 1 : index
    %c0_17 = arith.constant 0 : index
    %28 = vector.load %arg3[%c1, %c0_17] : memref<2x32xf32, #tpu.memory_space<vmem>>, vector<1x32xf32>
    %c0_i32 = arith.constant 0 : i32
    %29 = arith.index_cast %c0_i32 : i32 to index
    %c0_18 = arith.constant 0 : index
    %30 = vector.load %arg5[%29, %c0_18] : memref<8x128xf32, #tpu.memory_space<vmem>>, vector<1x128xf32>
    %cst_19 = arith.constant dense<0.000000e+00> : vector<1x128xf32>
    %31 = tpu.matmul %27, %1, %cst_19 {dimension_numbers = #tpu.dot_dimension_numbers<[1], [0], [0], [1], [0, 0, 1, 1], [], []>} : vector<1x32xf32>, vector<32x128xf32>, vector<1x128xf32> -> vector<1x128xf32>
    %32 = arith.addf %30, %31 : vector<1x128xf32>
    %33 = vector.extract_strided_slice %32 {offsets = [0, 0], sizes = [1, 96], strides = [1, 1]} : vector<1x128xf32> to vector<1x96xf32>
    %34 = arith.negf %33 : vector<1x96xf32>
    %35 = math.exp %34 : vector<1x96xf32>
    %cst_20 = arith.constant 1.000000e+00 : f32
    %36 = vector.broadcast %cst_20 : f32 to vector<1x96xf32>
    %37 = arith.addf %36, %35 : vector<1x96xf32>
    %38 = arith.divf %36, %37 : vector<1x96xf32>
    %39 = vector.extract_strided_slice %32 {offsets = [0, 96], sizes = [1, 32], strides = [1, 1]} : vector<1x128xf32> to vector<1x32xf32>
    %40 = math.tanh %39 : vector<1x32xf32>
    %41 = vector.extract_strided_slice %38 {offsets = [0, 32], sizes = [1, 32], strides = [1, 1]} : vector<1x96xf32> to vector<1x32xf32>
    %42 = arith.mulf %41, %28 : vector<1x32xf32>
    %43 = vector.extract_strided_slice %38 {offsets = [0, 0], sizes = [1, 32], strides = [1, 1]} : vector<1x96xf32> to vector<1x32xf32>
    %44 = arith.mulf %43, %40 : vector<1x32xf32>
    %45 = arith.addf %42, %44 : vector<1x32xf32>
    %46 = vector.extract_strided_slice %38 {offsets = [0, 64], sizes = [1, 32], strides = [1, 1]} : vector<1x96xf32> to vector<1x32xf32>
    %47 = math.tanh %45 : vector<1x32xf32>
    %48 = arith.mulf %46, %47 : vector<1x32xf32>
    %49 = arith.index_cast %c0_i32 : i32 to index
    %c0_21 = arith.constant 0 : index
    %50 = vector.load %arg6[%49, %c0_21] : memref<8x32xf32, #tpu.memory_space<vmem>>, vector<1x32xf32>
    tpu.vector_store %arg6[%49, %c0_21], %48 {strides = array<i32>} : memref<8x32xf32, #tpu.memory_space<vmem>>, vector<1x32xf32>,
    %c1_i32 = arith.constant 1 : i32
    %51 = arith.index_cast %c1_i32 : i32 to index
    %c0_22 = arith.constant 0 : index
    %52 = vector.load %arg5[%51, %c0_22] : memref<8x128xf32, #tpu.memory_space<vmem>>, vector<1x128xf32>
    %cst_23 = arith.constant dense<0.000000e+00> : vector<1x128xf32>
    %53 = tpu.matmul %48, %1, %cst_23 {dimension_numbers = #tpu.dot_dimension_numbers<[1], [0], [0], [1], [0, 0, 1, 1], [], []>} : vector<1x32xf32>, vector<32x128xf32>, vector<1x128xf32> -> vector<1x128xf32>
    %54 = arith.addf %52, %53 : vector<1x128xf32>
    %55 = vector.extract_strided_slice %54 {offsets = [0, 0], sizes = [1, 96], strides = [1, 1]} : vector<1x128xf32> to vector<1x96xf32>
    %56 = arith.negf %55 : vector<1x96xf32>
    %57 = math.exp %56 : vector<1x96xf32>
    %cst_24 = arith.constant 1.000000e+00 : f32
    %58 = vector.broadcast %cst_24 : f32 to vector<1x96xf32>
    %59 = arith.addf %58, %57 : vector<1x96xf32>
    %60 = arith.divf %58, %59 : vector<1x96xf32>
    %61 = vector.extract_strided_slice %54 {offsets = [0, 96], sizes = [1, 32], strides = [1, 1]} : vector<1x128xf32> to vector<1x32xf32>
    %62 = math.tanh %61 : vector<1x32xf32>
    %63 = vector.extract_strided_slice %60 {offsets = [0, 32], sizes = [1, 32], strides = [1, 1]} : vector<1x96xf32> to vector<1x32xf32>
    %64 = arith.mulf %63, %45 : vector<1x32xf32>
    %65 = vector.extract_strided_slice %60 {offsets = [0, 0], sizes = [1, 32], strides = [1, 1]} : vector<1x96xf32> to vector<1x32xf32>
    %66 = arith.mulf %65, %62 : vector<1x32xf32>
    %67 = arith.addf %64, %66 : vector<1x32xf32>
    %68 = vector.extract_strided_slice %60 {offsets = [0, 64], sizes = [1, 32], strides = [1, 1]} : vector<1x96xf32> to vector<1x32xf32>
    %69 = math.tanh %67 : vector<1x32xf32>
    %70 = arith.mulf %68, %69 : vector<1x32xf32>
    %71 = arith.index_cast %c1_i32 : i32 to index
    %c0_25 = arith.constant 0 : index
    %72 = vector.load %arg6[%71, %c0_25] : memref<8x32xf32, #tpu.memory_space<vmem>>, vector<1x32xf32>
    tpu.vector_store %arg6[%71, %c0_25], %70 {strides = array<i32>} : memref<8x32xf32, #tpu.memory_space<vmem>>, vector<1x32xf32>,
    %c2_i32 = arith.constant 2 : i32
    %73 = arith.index_cast %c2_i32 : i32 to index
    %c0_26 = arith.constant 0 : index
    %74 = vector.load %arg5[%73, %c0_26] : memref<8x128xf32, #tpu.memory_space<vmem>>, vector<1x128xf32>
    %cst_27 = arith.constant dense<0.000000e+00> : vector<1x128xf32>
    %75 = tpu.matmul %70, %1, %cst_27 {dimension_numbers = #tpu.dot_dimension_numbers<[1], [0], [0], [1], [0, 0, 1, 1], [], []>} : vector<1x32xf32>, vector<32x128xf32>, vector<1x128xf32> -> vector<1x128xf32>
    %76 = arith.addf %74, %75 : vector<1x128xf32>
    %77 = vector.extract_strided_slice %76 {offsets = [0, 0], sizes = [1, 96], strides = [1, 1]} : vector<1x128xf32> to vector<1x96xf32>
    %78 = arith.negf %77 : vector<1x96xf32>
    %79 = math.exp %78 : vector<1x96xf32>
    %cst_28 = arith.constant 1.000000e+00 : f32
    %80 = vector.broadcast %cst_28 : f32 to vector<1x96xf32>
    %81 = arith.addf %80, %79 : vector<1x96xf32>
    %82 = arith.divf %80, %81 : vector<1x96xf32>
    %83 = vector.extract_strided_slice %76 {offsets = [0, 96], sizes = [1, 32], strides = [1, 1]} : vector<1x128xf32> to vector<1x32xf32>
    %84 = math.tanh %83 : vector<1x32xf32>
    %85 = vector.extract_strided_slice %82 {offsets = [0, 32], sizes = [1, 32], strides = [1, 1]} : vector<1x96xf32> to vector<1x32xf32>
    %86 = arith.mulf %85, %67 : vector<1x32xf32>
    %87 = vector.extract_strided_slice %82 {offsets = [0, 0], sizes = [1, 32], strides = [1, 1]} : vector<1x96xf32> to vector<1x32xf32>
    %88 = arith.mulf %87, %84 : vector<1x32xf32>
    %89 = arith.addf %86, %88 : vector<1x32xf32>
    %90 = vector.extract_strided_slice %82 {offsets = [0, 64], sizes = [1, 32], strides = [1, 1]} : vector<1x96xf32> to vector<1x32xf32>
    %91 = math.tanh %89 : vector<1x32xf32>
    %92 = arith.mulf %90, %91 : vector<1x32xf32>
    %93 = arith.index_cast %c2_i32 : i32 to index
    %c0_29 = arith.constant 0 : index
    %94 = vector.load %arg6[%93, %c0_29] : memref<8x32xf32, #tpu.memory_space<vmem>>, vector<1x32xf32>
    tpu.vector_store %arg6[%93, %c0_29], %92 {strides = array<i32>} : memref<8x32xf32, #tpu.memory_space<vmem>>, vector<1x32xf32>,
    %c3_i32 = arith.constant 3 : i32
    %95 = arith.index_cast %c3_i32 : i32 to index
    %c0_30 = arith.constant 0 : index
    %96 = vector.load %arg5[%95, %c0_30] : memref<8x128xf32, #tpu.memory_space<vmem>>, vector<1x128xf32>
    %cst_31 = arith.constant dense<0.000000e+00> : vector<1x128xf32>
    %97 = tpu.matmul %92, %1, %cst_31 {dimension_numbers = #tpu.dot_dimension_numbers<[1], [0], [0], [1], [0, 0, 1, 1], [], []>} : vector<1x32xf32>, vector<32x128xf32>, vector<1x128xf32> -> vector<1x128xf32>
    %98 = arith.addf %96, %97 : vector<1x128xf32>
    %99 = vector.extract_strided_slice %98 {offsets = [0, 0], sizes = [1, 96], strides = [1, 1]} : vector<1x128xf32> to vector<1x96xf32>
    %100 = arith.negf %99 : vector<1x96xf32>
    %101 = math.exp %100 : vector<1x96xf32>
    %cst_32 = arith.constant 1.000000e+00 : f32
    %102 = vector.broadcast %cst_32 : f32 to vector<1x96xf32>
    %103 = arith.addf %102, %101 : vector<1x96xf32>
    %104 = arith.divf %102, %103 : vector<1x96xf32>
    %105 = vector.extract_strided_slice %98 {offsets = [0, 96], sizes = [1, 32], strides = [1, 1]} : vector<1x128xf32> to vector<1x32xf32>
    %106 = math.tanh %105 : vector<1x32xf32>
    %107 = vector.extract_strided_slice %104 {offsets = [0, 32], sizes = [1, 32], strides = [1, 1]} : vector<1x96xf32> to vector<1x32xf32>
    %108 = arith.mulf %107, %89 : vector<1x32xf32>
    %109 = vector.extract_strided_slice %104 {offsets = [0, 0], sizes = [1, 32], strides = [1, 1]} : vector<1x96xf32> to vector<1x32xf32>
    %110 = arith.mulf %109, %106 : vector<1x32xf32>
    %111 = arith.addf %108, %110 : vector<1x32xf32>
    %112 = vector.extract_strided_slice %104 {offsets = [0, 64], sizes = [1, 32], strides = [1, 1]} : vector<1x96xf32> to vector<1x32xf32>
    %113 = math.tanh %111 : vector<1x32xf32>
    %114 = arith.mulf %112, %113 : vector<1x32xf32>
    %115 = arith.index_cast %c3_i32 : i32 to index
    %c0_33 = arith.constant 0 : index
    %116 = vector.load %arg6[%115, %c0_33] : memref<8x32xf32, #tpu.memory_space<vmem>>, vector<1x32xf32>
    tpu.vector_store %arg6[%115, %c0_33], %114 {strides = array<i32>} : memref<8x32xf32, #tpu.memory_space<vmem>>, vector<1x32xf32>,
    %c4_i32 = arith.constant 4 : i32
    %117 = arith.index_cast %c4_i32 : i32 to index
    %c0_34 = arith.constant 0 : index
    %118 = vector.load %arg5[%117, %c0_34] : memref<8x128xf32, #tpu.memory_space<vmem>>, vector<1x128xf32>
    %cst_35 = arith.constant dense<0.000000e+00> : vector<1x128xf32>
    %119 = tpu.matmul %114, %1, %cst_35 {dimension_numbers = #tpu.dot_dimension_numbers<[1], [0], [0], [1], [0, 0, 1, 1], [], []>} : vector<1x32xf32>, vector<32x128xf32>, vector<1x128xf32> -> vector<1x128xf32>
    %120 = arith.addf %118, %119 : vector<1x128xf32>
    %121 = vector.extract_strided_slice %120 {offsets = [0, 0], sizes = [1, 96], strides = [1, 1]} : vector<1x128xf32> to vector<1x96xf32>
    %122 = arith.negf %121 : vector<1x96xf32>
    %123 = math.exp %122 : vector<1x96xf32>
    %cst_36 = arith.constant 1.000000e+00 : f32
    %124 = vector.broadcast %cst_36 : f32 to vector<1x96xf32>
    %125 = arith.addf %124, %123 : vector<1x96xf32>
    %126 = arith.divf %124, %125 : vector<1x96xf32>
    %127 = vector.extract_strided_slice %120 {offsets = [0, 96], sizes = [1, 32], strides = [1, 1]} : vector<1x128xf32> to vector<1x32xf32>
    %128 = math.tanh %127 : vector<1x32xf32>
    %129 = vector.extract_strided_slice %126 {offsets = [0, 32], sizes = [1, 32], strides = [1, 1]} : vector<1x96xf32> to vector<1x32xf32>
    %130 = arith.mulf %129, %111 : vector<1x32xf32>
    %131 = vector.extract_strided_slice %126 {offsets = [0, 0], sizes = [1, 32], strides = [1, 1]} : vector<1x96xf32> to vector<1x32xf32>
    %132 = arith.mulf %131, %128 : vector<1x32xf32>
    %133 = arith.addf %130, %132 : vector<1x32xf32>
    %134 = vector.extract_strided_slice %126 {offsets = [0, 64], sizes = [1, 32], strides = [1, 1]} : vector<1x96xf32> to vector<1x32xf32>
    %135 = math.tanh %133 : vector<1x32xf32>
    %136 = arith.mulf %134, %135 : vector<1x32xf32>
    %137 = arith.index_cast %c4_i32 : i32 to index
    %c0_37 = arith.constant 0 : index
    %138 = vector.load %arg6[%137, %c0_37] : memref<8x32xf32, #tpu.memory_space<vmem>>, vector<1x32xf32>
    tpu.vector_store %arg6[%137, %c0_37], %136 {strides = array<i32>} : memref<8x32xf32, #tpu.memory_space<vmem>>, vector<1x32xf32>,
    %c5_i32 = arith.constant 5 : i32
    %139 = arith.index_cast %c5_i32 : i32 to index
    %c0_38 = arith.constant 0 : index
    %140 = vector.load %arg5[%139, %c0_38] : memref<8x128xf32, #tpu.memory_space<vmem>>, vector<1x128xf32>
    %cst_39 = arith.constant dense<0.000000e+00> : vector<1x128xf32>
    %141 = tpu.matmul %136, %1, %cst_39 {dimension_numbers = #tpu.dot_dimension_numbers<[1], [0], [0], [1], [0, 0, 1, 1], [], []>} : vector<1x32xf32>, vector<32x128xf32>, vector<1x128xf32> -> vector<1x128xf32>
    %142 = arith.addf %140, %141 : vector<1x128xf32>
    %143 = vector.extract_strided_slice %142 {offsets = [0, 0], sizes = [1, 96], strides = [1, 1]} : vector<1x128xf32> to vector<1x96xf32>
    %144 = arith.negf %143 : vector<1x96xf32>
    %145 = math.exp %144 : vector<1x96xf32>
    %cst_40 = arith.constant 1.000000e+00 : f32
    %146 = vector.broadcast %cst_40 : f32 to vector<1x96xf32>
    %147 = arith.addf %146, %145 : vector<1x96xf32>
    %148 = arith.divf %146, %147 : vector<1x96xf32>
    %149 = vector.extract_strided_slice %142 {offsets = [0, 96], sizes = [1, 32], strides = [1, 1]} : vector<1x128xf32> to vector<1x32xf32>
    %150 = math.tanh %149 : vector<1x32xf32>
    %151 = vector.extract_strided_slice %148 {offsets = [0, 32], sizes = [1, 32], strides = [1, 1]} : vector<1x96xf32> to vector<1x32xf32>
    %152 = arith.mulf %151, %133 : vector<1x32xf32>
    %153 = vector.extract_strided_slice %148 {offsets = [0, 0], sizes = [1, 32], strides = [1, 1]} : vector<1x96xf32> to vector<1x32xf32>
    %154 = arith.mulf %153, %150 : vector<1x32xf32>
    %155 = arith.addf %152, %154 : vector<1x32xf32>
    %156 = vector.extract_strided_slice %148 {offsets = [0, 64], sizes = [1, 32], strides = [1, 1]} : vector<1x96xf32> to vector<1x32xf32>
    %157 = math.tanh %155 : vector<1x32xf32>
    %158 = arith.mulf %156, %157 : vector<1x32xf32>
    %159 = arith.index_cast %c5_i32 : i32 to index
    %c0_41 = arith.constant 0 : index
    %160 = vector.load %arg6[%159, %c0_41] : memref<8x32xf32, #tpu.memory_space<vmem>>, vector<1x32xf32>
    tpu.vector_store %arg6[%159, %c0_41], %158 {strides = array<i32>} : memref<8x32xf32, #tpu.memory_space<vmem>>, vector<1x32xf32>,
    %c6_i32 = arith.constant 6 : i32
    %161 = arith.index_cast %c6_i32 : i32 to index
    %c0_42 = arith.constant 0 : index
    %162 = vector.load %arg5[%161, %c0_42] : memref<8x128xf32, #tpu.memory_space<vmem>>, vector<1x128xf32>
    %cst_43 = arith.constant dense<0.000000e+00> : vector<1x128xf32>
    %163 = tpu.matmul %158, %1, %cst_43 {dimension_numbers = #tpu.dot_dimension_numbers<[1], [0], [0], [1], [0, 0, 1, 1], [], []>} : vector<1x32xf32>, vector<32x128xf32>, vector<1x128xf32> -> vector<1x128xf32>
    %164 = arith.addf %162, %163 : vector<1x128xf32>
    %165 = vector.extract_strided_slice %164 {offsets = [0, 0], sizes = [1, 96], strides = [1, 1]} : vector<1x128xf32> to vector<1x96xf32>
    %166 = arith.negf %165 : vector<1x96xf32>
    %167 = math.exp %166 : vector<1x96xf32>
    %cst_44 = arith.constant 1.000000e+00 : f32
    %168 = vector.broadcast %cst_44 : f32 to vector<1x96xf32>
    %169 = arith.addf %168, %167 : vector<1x96xf32>
    %170 = arith.divf %168, %169 : vector<1x96xf32>
    %171 = vector.extract_strided_slice %164 {offsets = [0, 96], sizes = [1, 32], strides = [1, 1]} : vector<1x128xf32> to vector<1x32xf32>
    %172 = math.tanh %171 : vector<1x32xf32>
    %173 = vector.extract_strided_slice %170 {offsets = [0, 32], sizes = [1, 32], strides = [1, 1]} : vector<1x96xf32> to vector<1x32xf32>
    %174 = arith.mulf %173, %155 : vector<1x32xf32>
    %175 = vector.extract_strided_slice %170 {offsets = [0, 0], sizes = [1, 32], strides = [1, 1]} : vector<1x96xf32> to vector<1x32xf32>
    %176 = arith.mulf %175, %172 : vector<1x32xf32>
    %177 = arith.addf %174, %176 : vector<1x32xf32>
    %178 = vector.extract_strided_slice %170 {offsets = [0, 64], sizes = [1, 32], strides = [1, 1]} : vector<1x96xf32> to vector<1x32xf32>
    %179 = math.tanh %177 : vector<1x32xf32>
    %180 = arith.mulf %178, %179 : vector<1x32xf32>
    %181 = arith.index_cast %c6_i32 : i32 to index
    %c0_45 = arith.constant 0 : index
    %182 = vector.load %arg6[%181, %c0_45] : memref<8x32xf32, #tpu.memory_space<vmem>>, vector<1x32xf32>
    tpu.vector_store %arg6[%181, %c0_45], %180 {strides = array<i32>} : memref<8x32xf32, #tpu.memory_space<vmem>>, vector<1x32xf32>,
    %c7_i32 = arith.constant 7 : i32
    %183 = arith.index_cast %c7_i32 : i32 to index
    %c0_46 = arith.constant 0 : index
    %184 = vector.load %arg5[%183, %c0_46] : memref<8x128xf32, #tpu.memory_space<vmem>>, vector<1x128xf32>
    %cst_47 = arith.constant dense<0.000000e+00> : vector<1x128xf32>
    %185 = tpu.matmul %180, %1, %cst_47 {dimension_numbers = #tpu.dot_dimension_numbers<[1], [0], [0], [1], [0, 0, 1, 1], [], []>} : vector<1x32xf32>, vector<32x128xf32>, vector<1x128xf32> -> vector<1x128xf32>
    %186 = arith.addf %184, %185 : vector<1x128xf32>
    %187 = vector.extract_strided_slice %186 {offsets = [0, 0], sizes = [1, 96], strides = [1, 1]} : vector<1x128xf32> to vector<1x96xf32>
    %188 = arith.negf %187 : vector<1x96xf32>
    %189 = math.exp %188 : vector<1x96xf32>
    %cst_48 = arith.constant 1.000000e+00 : f32
    %190 = vector.broadcast %cst_48 : f32 to vector<1x96xf32>
    %191 = arith.addf %190, %189 : vector<1x96xf32>
    %192 = arith.divf %190, %191 : vector<1x96xf32>
    %193 = vector.extract_strided_slice %186 {offsets = [0, 96], sizes = [1, 32], strides = [1, 1]} : vector<1x128xf32> to vector<1x32xf32>
    %194 = math.tanh %193 : vector<1x32xf32>
    %195 = vector.extract_strided_slice %192 {offsets = [0, 32], sizes = [1, 32], strides = [1, 1]} : vector<1x96xf32> to vector<1x32xf32>
    %196 = arith.mulf %195, %177 : vector<1x32xf32>
    %197 = vector.extract_strided_slice %192 {offsets = [0, 0], sizes = [1, 32], strides = [1, 1]} : vector<1x96xf32> to vector<1x32xf32>
    %198 = arith.mulf %197, %194 : vector<1x32xf32>
    %199 = arith.addf %196, %198 : vector<1x32xf32>
    %200 = vector.extract_strided_slice %192 {offsets = [0, 64], sizes = [1, 32], strides = [1, 1]} : vector<1x96xf32> to vector<1x32xf32>
    %201 = math.tanh %199 : vector<1x32xf32>
    %202 = arith.mulf %200, %201 : vector<1x32xf32>
    %203 = arith.index_cast %c7_i32 : i32 to index
    %c0_49 = arith.constant 0 : index
    %204 = vector.load %arg6[%203, %c0_49] : memref<8x32xf32, #tpu.memory_space<vmem>>, vector<1x32xf32>
    tpu.vector_store %arg6[%203, %c0_49], %202 {strides = array<i32>} : memref<8x32xf32, #tpu.memory_space<vmem>>, vector<1x32xf32>,
    %c8_i32 = arith.constant 8 : i32
    %c0_50 = arith.constant 0 : index
    %c0_51 = arith.constant 0 : index
    %205 = vector.load %arg6[%c0_50, %c0_51] : memref<8x32xf32, #tpu.memory_space<vmem>>, vector<8x32xf32>
    %206 = tpu.iota {dimensions = array<i32: 0>} : vector<8x8xi32>
    %207 = tpu.iota {dimensions = array<i32: 1>} : vector<8x8xi32>
    %208 = arith.addi %206, %207 : vector<8x8xi32>
    %c7_i32_52 = arith.constant 7 : i32
    %209 = vector.broadcast %c7_i32_52 : i32 to vector<8x8xi32>
    %210 = arith.cmpi eq, %208, %209 : vector<8x8xi32>
    %211 = arith.extui %210 : vector<8x8xi1> to vector<8x8xi32>
    %212 = arith.sitofp %211 : vector<8x8xi32> to vector<8x8xf32>
    %213 = vector.extract_strided_slice %205 {offsets = [0, 16], sizes = [8, 16], strides = [1, 1]} : vector<8x32xf32> to vector<8x16xf32>
    %cst_53 = arith.constant dense<0.000000e+00> : vector<8x16xf32>
    %214 = tpu.matmul %212, %213, %cst_53 {dimension_numbers = #tpu.dot_dimension_numbers<[1], [0], [0], [1], [0, 0, 1, 1], [], []>} : vector<8x8xf32>, vector<8x16xf32>, vector<8x16xf32> -> vector<8x16xf32>
    %215 = vector.extract_strided_slice %205 {offsets = [0, 0], sizes = [8, 16], strides = [1, 1]} : vector<8x32xf32> to vector<8x16xf32>
    %cst_54 = arith.constant dense<0.000000e+00> : vector<8x5xf32>
    %216 = tpu.matmul %215, %4, %cst_54 {dimension_numbers = #tpu.dot_dimension_numbers<[1], [0], [0], [1], [0, 0, 1, 1], [], []>} : vector<8x16xf32>, vector<16x5xf32>, vector<8x5xf32> -> vector<8x5xf32>
    %cst_55 = arith.constant dense<0.000000e+00> : vector<8x5xf32>
    %217 = tpu.matmul %214, %5, %cst_55 {dimension_numbers = #tpu.dot_dimension_numbers<[1], [0], [0], [1], [0, 0, 1, 1], [], []>} : vector<8x16xf32>, vector<16x5xf32>, vector<8x5xf32> -> vector<8x5xf32>
    %218 = arith.addf %216, %217 : vector<8x5xf32>
    %219 = vector.broadcast %3 : vector<1x5xf32> to vector<8x5xf32>
    %220 = arith.addf %218, %219 : vector<8x5xf32>
    %c0_56 = arith.constant 0 : index
    %c0_57 = arith.constant 0 : index
    %221 = vector.load %arg7[%c0_56, %c0_57] : memref<8x5xf32, #tpu.memory_space<vmem>>, vector<8x5xf32>
    tpu.vector_store %arg7[%c0_56, %c0_57], %220 {strides = array<i32>} : memref<8x5xf32, #tpu.memory_space<vmem>>, vector<8x5xf32>,
    %222 = tpu.iota {dimensions = array<i32: 1>} : vector<1x5xi32>
    %c3_i32_58 = arith.constant 3 : i32
    %223 = vector.broadcast %c3_i32_58 : i32 to vector<1x5xi32>
    %224 = arith.cmpi eq, %222, %223 : vector<1x5xi32>
    %cst_59 = arith.constant 0.000000e+00 : f32
    %cst_60 = arith.constant -1.000000e+04 : f32
    %225 = vector.broadcast %cst_59 : f32 to vector<1x5xf32>
    %226 = vector.broadcast %cst_60 : f32 to vector<1x5xf32>
    %227 = arith.select %224, %225, %226 : vector<1x5xi1>, vector<1x5xf32>
    %c0_i32_61 = arith.constant 0 : i32
    %228 = vector.broadcast %227 : vector<1x5xf32> to vector<5x5xf32>
    %229 = arith.addf %228, %6 : vector<5x5xf32>
    %230 = tpu.reduce_index %229 {axis = 1 : i32, kind = #tpu.reduction_kind<arg_max>} : vector<5x5xf32> -> vector<5xi32>
    %231 = vector.shape_cast %230 : vector<5xi32> to vector<1x5xi32>
    %232 = arith.index_cast %c0_i32_61 : i32 to index
    %c0_62 = arith.constant 0 : index
    %233 = vector.load %arg8[%232, %c0_62] : memref<8x5xi32, #tpu.memory_space<vmem>>, vector<1x5xi32>
    tpu.vector_store %arg8[%232, %c0_62], %231 {strides = array<i32>} : memref<8x5xi32, #tpu.memory_space<vmem>>, vector<1x5xi32>,
    %cst_63 = arith.constant dense<0xFF800000> : vector<5xf32>
    %234 = vector.multi_reduction <maximumf>, %229, %cst_63 [1] : vector<5x5xf32> to vector<5xf32>
    %235 = vector.shape_cast %234 : vector<5xf32> to vector<1x5xf32>
    %236 = arith.index_cast %c0_i32_61 : i32 to index
    %c0_64 = arith.constant 0 : index
    %237 = vector.load %arg7[%236, %c0_64] : memref<8x5xf32, #tpu.memory_space<vmem>>, vector<1x5xf32>
    %238 = arith.addf %235, %237 : vector<1x5xf32>
    %c1_i32_65 = arith.constant 1 : i32
    %239 = vector.broadcast %238 : vector<1x5xf32> to vector<5x5xf32>
    %240 = arith.addf %239, %6 : vector<5x5xf32>
    %241 = tpu.reduce_index %240 {axis = 1 : i32, kind = #tpu.reduction_kind<arg_max>} : vector<5x5xf32> -> vector<5xi32>
    %242 = vector.shape_cast %241 : vector<5xi32> to vector<1x5xi32>
    %243 = arith.index_cast %c1_i32_65 : i32 to index
    %c0_66 = arith.constant 0 : index
    %244 = vector.load %arg8[%243, %c0_66] : memref<8x5xi32, #tpu.memory_space<vmem>>, vector<1x5xi32>
    tpu.vector_store %arg8[%243, %c0_66], %242 {strides = array<i32>} : memref<8x5xi32, #tpu.memory_space<vmem>>, vector<1x5xi32>,
    %cst_67 = arith.constant dense<0xFF800000> : vector<5xf32>
    %245 = vector.multi_reduction <maximumf>, %240, %cst_67 [1] : vector<5x5xf32> to vector<5xf32>
    %246 = vector.shape_cast %245 : vector<5xf32> to vector<1x5xf32>
    %247 = arith.index_cast %c1_i32_65 : i32 to index
    %c0_68 = arith.constant 0 : index
    %248 = vector.load %arg7[%247, %c0_68] : memref<8x5xf32, #tpu.memory_space<vmem>>, vector<1x5xf32>
    %249 = arith.addf %246, %248 : vector<1x5xf32>
    %c2_i32_69 = arith.constant 2 : i32
    %250 = vector.broadcast %249 : vector<1x5xf32> to vector<5x5xf32>
    %251 = arith.addf %250, %6 : vector<5x5xf32>
    %252 = tpu.reduce_index %251 {axis = 1 : i32, kind = #tpu.reduction_kind<arg_max>} : vector<5x5xf32> -> vector<5xi32>
    %253 = vector.shape_cast %252 : vector<5xi32> to vector<1x5xi32>
    %254 = arith.index_cast %c2_i32_69 : i32 to index
    %c0_70 = arith.constant 0 : index
    %255 = vector.load %arg8[%254, %c0_70] : memref<8x5xi32, #tpu.memory_space<vmem>>, vector<1x5xi32>
    tpu.vector_store %arg8[%254, %c0_70], %253 {strides = array<i32>} : memref<8x5xi32, #tpu.memory_space<vmem>>, vector<1x5xi32>,
    %cst_71 = arith.constant dense<0xFF800000> : vector<5xf32>
    %256 = vector.multi_reduction <maximumf>, %251, %cst_71 [1] : vector<5x5xf32> to vector<5xf32>
    %257 = vector.shape_cast %256 : vector<5xf32> to vector<1x5xf32>
    %258 = arith.index_cast %c2_i32_69 : i32 to index
    %c0_72 = arith.constant 0 : index
    %259 = vector.load %arg7[%258, %c0_72] : memref<8x5xf32, #tpu.memory_space<vmem>>, vector<1x5xf32>
    %260 = arith.addf %257, %259 : vector<1x5xf32>
    %c3_i32_73 = arith.constant 3 : i32
    %261 = vector.broadcast %260 : vector<1x5xf32> to vector<5x5xf32>
    %262 = arith.addf %261, %6 : vector<5x5xf32>
    %263 = tpu.reduce_index %262 {axis = 1 : i32, kind = #tpu.reduction_kind<arg_max>} : vector<5x5xf32> -> vector<5xi32>
    %264 = vector.shape_cast %263 : vector<5xi32> to vector<1x5xi32>
    %265 = arith.index_cast %c3_i32_73 : i32 to index
    %c0_74 = arith.constant 0 : index
    %266 = vector.load %arg8[%265, %c0_74] : memref<8x5xi32, #tpu.memory_space<vmem>>, vector<1x5xi32>
    tpu.vector_store %arg8[%265, %c0_74], %264 {strides = array<i32>} : memref<8x5xi32, #tpu.memory_space<vmem>>, vector<1x5xi32>,
    %cst_75 = arith.constant dense<0xFF800000> : vector<5xf32>
    %267 = vector.multi_reduction <maximumf>, %262, %cst_75 [1] : vector<5x5xf32> to vector<5xf32>
    %268 = vector.shape_cast %267 : vector<5xf32> to vector<1x5xf32>
    %269 = arith.index_cast %c3_i32_73 : i32 to index
    %c0_76 = arith.constant 0 : index
    %270 = vector.load %arg7[%269, %c0_76] : memref<8x5xf32, #tpu.memory_space<vmem>>, vector<1x5xf32>
    %271 = arith.addf %268, %270 : vector<1x5xf32>
    %c4_i32_77 = arith.constant 4 : i32
    %272 = vector.broadcast %271 : vector<1x5xf32> to vector<5x5xf32>
    %273 = arith.addf %272, %6 : vector<5x5xf32>
    %274 = tpu.reduce_index %273 {axis = 1 : i32, kind = #tpu.reduction_kind<arg_max>} : vector<5x5xf32> -> vector<5xi32>
    %275 = vector.shape_cast %274 : vector<5xi32> to vector<1x5xi32>
    %276 = arith.index_cast %c4_i32_77 : i32 to index
    %c0_78 = arith.constant 0 : index
    %277 = vector.load %arg8[%276, %c0_78] : memref<8x5xi32, #tpu.memory_space<vmem>>, vector<1x5xi32>
    tpu.vector_store %arg8[%276, %c0_78], %275 {strides = array<i32>} : memref<8x5xi32, #tpu.memory_space<vmem>>, vector<1x5xi32>,
    %cst_79 = arith.constant dense<0xFF800000> : vector<5xf32>
    %278 = vector.multi_reduction <maximumf>, %273, %cst_79 [1] : vector<5x5xf32> to vector<5xf32>
    %279 = vector.shape_cast %278 : vector<5xf32> to vector<1x5xf32>
    %280 = arith.index_cast %c4_i32_77 : i32 to index
    %c0_80 = arith.constant 0 : index
    %281 = vector.load %arg7[%280, %c0_80] : memref<8x5xf32, #tpu.memory_space<vmem>>, vector<1x5xf32>
    %282 = arith.addf %279, %281 : vector<1x5xf32>
    %c5_i32_81 = arith.constant 5 : i32
    %283 = vector.broadcast %282 : vector<1x5xf32> to vector<5x5xf32>
    %284 = arith.addf %283, %6 : vector<5x5xf32>
    %285 = tpu.reduce_index %284 {axis = 1 : i32, kind = #tpu.reduction_kind<arg_max>} : vector<5x5xf32> -> vector<5xi32>
    %286 = vector.shape_cast %285 : vector<5xi32> to vector<1x5xi32>
    %287 = arith.index_cast %c5_i32_81 : i32 to index
    %c0_82 = arith.constant 0 : index
    %288 = vector.load %arg8[%287, %c0_82] : memref<8x5xi32, #tpu.memory_space<vmem>>, vector<1x5xi32>
    tpu.vector_store %arg8[%287, %c0_82], %286 {strides = array<i32>} : memref<8x5xi32, #tpu.memory_space<vmem>>, vector<1x5xi32>,
    %cst_83 = arith.constant dense<0xFF800000> : vector<5xf32>
    %289 = vector.multi_reduction <maximumf>, %284, %cst_83 [1] : vector<5x5xf32> to vector<5xf32>
    %290 = vector.shape_cast %289 : vector<5xf32> to vector<1x5xf32>
    %291 = arith.index_cast %c5_i32_81 : i32 to index
    %c0_84 = arith.constant 0 : index
    %292 = vector.load %arg7[%291, %c0_84] : memref<8x5xf32, #tpu.memory_space<vmem>>, vector<1x5xf32>
    %293 = arith.addf %290, %292 : vector<1x5xf32>
    %c6_i32_85 = arith.constant 6 : i32
    %294 = vector.broadcast %293 : vector<1x5xf32> to vector<5x5xf32>
    %295 = arith.addf %294, %6 : vector<5x5xf32>
    %296 = tpu.reduce_index %295 {axis = 1 : i32, kind = #tpu.reduction_kind<arg_max>} : vector<5x5xf32> -> vector<5xi32>
    %297 = vector.shape_cast %296 : vector<5xi32> to vector<1x5xi32>
    %298 = arith.index_cast %c6_i32_85 : i32 to index
    %c0_86 = arith.constant 0 : index
    %299 = vector.load %arg8[%298, %c0_86] : memref<8x5xi32, #tpu.memory_space<vmem>>, vector<1x5xi32>
    tpu.vector_store %arg8[%298, %c0_86], %297 {strides = array<i32>} : memref<8x5xi32, #tpu.memory_space<vmem>>, vector<1x5xi32>,
    %cst_87 = arith.constant dense<0xFF800000> : vector<5xf32>
    %300 = vector.multi_reduction <maximumf>, %295, %cst_87 [1] : vector<5x5xf32> to vector<5xf32>
    %301 = vector.shape_cast %300 : vector<5xf32> to vector<1x5xf32>
    %302 = arith.index_cast %c6_i32_85 : i32 to index
    %c0_88 = arith.constant 0 : index
    %303 = vector.load %arg7[%302, %c0_88] : memref<8x5xf32, #tpu.memory_space<vmem>>, vector<1x5xf32>
    %304 = arith.addf %301, %303 : vector<1x5xf32>
    %c7_i32_89 = arith.constant 7 : i32
    %305 = vector.broadcast %304 : vector<1x5xf32> to vector<5x5xf32>
    %306 = arith.addf %305, %6 : vector<5x5xf32>
    %307 = tpu.reduce_index %306 {axis = 1 : i32, kind = #tpu.reduction_kind<arg_max>} : vector<5x5xf32> -> vector<5xi32>
    %308 = vector.shape_cast %307 : vector<5xi32> to vector<1x5xi32>
    %309 = arith.index_cast %c7_i32_89 : i32 to index
    %c0_90 = arith.constant 0 : index
    %310 = vector.load %arg8[%309, %c0_90] : memref<8x5xi32, #tpu.memory_space<vmem>>, vector<1x5xi32>
    tpu.vector_store %arg8[%309, %c0_90], %308 {strides = array<i32>} : memref<8x5xi32, #tpu.memory_space<vmem>>, vector<1x5xi32>,
    %cst_91 = arith.constant dense<0xFF800000> : vector<5xf32>
    %311 = vector.multi_reduction <maximumf>, %306, %cst_91 [1] : vector<5x5xf32> to vector<5xf32>
    %312 = vector.shape_cast %311 : vector<5xf32> to vector<1x5xf32>
    %313 = arith.index_cast %c7_i32_89 : i32 to index
    %c0_92 = arith.constant 0 : index
    %314 = vector.load %arg7[%313, %c0_92] : memref<8x5xf32, #tpu.memory_space<vmem>>, vector<1x5xf32>
    %315 = arith.addf %312, %314 : vector<1x5xf32>
    %c8_i32_93 = arith.constant 8 : i32
    %316 = vector.extract_strided_slice %6 {offsets = [4, 0], sizes = [1, 5], strides = [1, 1]} : vector<5x5xf32> to vector<1x5xf32>
    %317 = arith.addf %315, %316 : vector<1x5xf32>
    %318 = vector.shape_cast %317 : vector<1x5xf32> to vector<1x1x5xf32>
    %cst_94 = arith.constant dense<0xFF800000> : vector<1xf32>
    %319 = vector.multi_reduction <maximumf>, %318, %cst_94 [1, 2] : vector<1x1x5xf32> to vector<1xf32>
    %320 = vector.shape_cast %319 : vector<1xf32> to vector<1x1x1xf32>
    %321 = vector.extract %320[0, 0, 0] : f32 from vector<1x1x1xf32>
    %322 = vector.broadcast %321 : f32 to vector<1x5xf32>
    %323 = arith.cmpf oeq, %317, %322 : vector<1x5xf32>
    %c5_i32_95 = arith.constant 5 : i32
    %324 = vector.broadcast %c5_i32_95 : i32 to vector<1x5xi32>
    %325 = arith.select %323, %222, %324 : vector<1x5xi1>, vector<1x5xi32>
    %326 = vector.shape_cast %325 : vector<1x5xi32> to vector<1x1x5xi32>
    %cst_96 = arith.constant dense<2147483647> : vector<1xi32>
    %327 = vector.multi_reduction <minsi>, %326, %cst_96 [1, 2] : vector<1x1x5xi32> to vector<1xi32>
    %328 = vector.shape_cast %327 : vector<1xi32> to vector<1x1x1xi32>
    %329 = vector.extract %328[0, 0, 0] : i32 from vector<1x1x1xi32>
    %330 = tpu.iota {dimensions = array<i32: 1>} : vector<1x128xi32>
    %c7_i32_97 = arith.constant 7 : i32
    %331 = vector.broadcast %c7_i32_97 : i32 to vector<1x128xi32>
    %332 = arith.cmpi eq, %330, %331 : vector<1x128xi32>
    %c0_i32_98 = arith.constant 0 : i32
    %333 = vector.broadcast %329 : i32 to vector<1x128xi32>
    %334 = vector.broadcast %c0_i32_98 : i32 to vector<1x128xi32>
    %335 = arith.select %332, %333, %334 : vector<1x128xi1>, vector<1x128xi32>
    %c0_i32_99 = arith.constant 0 : i32
    %c7_i32_100 = arith.constant 7 : i32
    %336 = arith.subi %c7_i32_100, %c0_i32_99 : i32
    %337 = arith.index_cast %336 : i32 to index
    %c0_101 = arith.constant 0 : index
    %338 = vector.load %arg8[%337, %c0_101] : memref<8x5xi32, #tpu.memory_space<vmem>>, vector<1x5xi32>
    %339 = vector.broadcast %329 : i32 to vector<1x5xi32>
    %340 = arith.cmpi eq, %222, %339 : vector<1x5xi32>
    %c0_i32_102 = arith.constant 0 : i32
    %341 = vector.broadcast %c0_i32_102 : i32 to vector<1x5xi32>
    %342 = arith.select %340, %338, %341 : vector<1x5xi1>, vector<1x5xi32>
    %343 = vector.shape_cast %342 : vector<1x5xi32> to vector<1x1x5xi32>
    %cst_103 = arith.constant dense<0> : vector<1xi32>
    %344 = vector.multi_reduction <add>, %343, %cst_103 [1, 2] : vector<1x1x5xi32> to vector<1xi32>
    %345 = vector.shape_cast %344 : vector<1xi32> to vector<1x1x1xi32>
    %346 = vector.extract %345[0, 0, 0] : i32 from vector<1x1x1xi32>
    %c1_i32_104 = arith.constant 1 : i32
    %347 = arith.subi %336, %c1_i32_104 : i32
    %348 = vector.broadcast %347 : i32 to vector<1x128xi32>
    %349 = arith.cmpi eq, %330, %348 : vector<1x128xi32>
    %350 = vector.broadcast %346 : i32 to vector<1x128xi32>
    %351 = arith.select %349, %350, %335 : vector<1x128xi1>, vector<1x128xi32>
    %c1_i32_105 = arith.constant 1 : i32
    %c7_i32_106 = arith.constant 7 : i32
    %352 = arith.subi %c7_i32_106, %c1_i32_105 : i32
    %353 = arith.index_cast %352 : i32 to index
    %c0_107 = arith.constant 0 : index
    %354 = vector.load %arg8[%353, %c0_107] : memref<8x5xi32, #tpu.memory_space<vmem>>, vector<1x5xi32>
    %355 = vector.broadcast %346 : i32 to vector<1x5xi32>
    %356 = arith.cmpi eq, %222, %355 : vector<1x5xi32>
    %c0_i32_108 = arith.constant 0 : i32
    %357 = vector.broadcast %c0_i32_108 : i32 to vector<1x5xi32>
    %358 = arith.select %356, %354, %357 : vector<1x5xi1>, vector<1x5xi32>
    %359 = vector.shape_cast %358 : vector<1x5xi32> to vector<1x1x5xi32>
    %cst_109 = arith.constant dense<0> : vector<1xi32>
    %360 = vector.multi_reduction <add>, %359, %cst_109 [1, 2] : vector<1x1x5xi32> to vector<1xi32>
    %361 = vector.shape_cast %360 : vector<1xi32> to vector<1x1x1xi32>
    %362 = vector.extract %361[0, 0, 0] : i32 from vector<1x1x1xi32>
    %c1_i32_110 = arith.constant 1 : i32
    %363 = arith.subi %352, %c1_i32_110 : i32
    %364 = vector.broadcast %363 : i32 to vector<1x128xi32>
    %365 = arith.cmpi eq, %330, %364 : vector<1x128xi32>
    %366 = vector.broadcast %362 : i32 to vector<1x128xi32>
    %367 = arith.select %365, %366, %351 : vector<1x128xi1>, vector<1x128xi32>
    %c2_i32_111 = arith.constant 2 : i32
    %c7_i32_112 = arith.constant 7 : i32
    %368 = arith.subi %c7_i32_112, %c2_i32_111 : i32
    %369 = arith.index_cast %368 : i32 to index
    %c0_113 = arith.constant 0 : index
    %370 = vector.load %arg8[%369, %c0_113] : memref<8x5xi32, #tpu.memory_space<vmem>>, vector<1x5xi32>
    %371 = vector.broadcast %362 : i32 to vector<1x5xi32>
    %372 = arith.cmpi eq, %222, %371 : vector<1x5xi32>
    %c0_i32_114 = arith.constant 0 : i32
    %373 = vector.broadcast %c0_i32_114 : i32 to vector<1x5xi32>
    %374 = arith.select %372, %370, %373 : vector<1x5xi1>, vector<1x5xi32>
    %375 = vector.shape_cast %374 : vector<1x5xi32> to vector<1x1x5xi32>
    %cst_115 = arith.constant dense<0> : vector<1xi32>
    %376 = vector.multi_reduction <add>, %375, %cst_115 [1, 2] : vector<1x1x5xi32> to vector<1xi32>
    %377 = vector.shape_cast %376 : vector<1xi32> to vector<1x1x1xi32>
    %378 = vector.extract %377[0, 0, 0] : i32 from vector<1x1x1xi32>
    %c1_i32_116 = arith.constant 1 : i32
    %379 = arith.subi %368, %c1_i32_116 : i32
    %380 = vector.broadcast %379 : i32 to vector<1x128xi32>
    %381 = arith.cmpi eq, %330, %380 : vector<1x128xi32>
    %382 = vector.broadcast %378 : i32 to vector<1x128xi32>
    %383 = arith.select %381, %382, %367 : vector<1x128xi1>, vector<1x128xi32>
    %c3_i32_117 = arith.constant 3 : i32
    %c7_i32_118 = arith.constant 7 : i32
    %384 = arith.subi %c7_i32_118, %c3_i32_117 : i32
    %385 = arith.index_cast %384 : i32 to index
    %c0_119 = arith.constant 0 : index
    %386 = vector.load %arg8[%385, %c0_119] : memref<8x5xi32, #tpu.memory_space<vmem>>, vector<1x5xi32>
    %387 = vector.broadcast %378 : i32 to vector<1x5xi32>
    %388 = arith.cmpi eq, %222, %387 : vector<1x5xi32>
    %c0_i32_120 = arith.constant 0 : i32
    %389 = vector.broadcast %c0_i32_120 : i32 to vector<1x5xi32>
    %390 = arith.select %388, %386, %389 : vector<1x5xi1>, vector<1x5xi32>
    %391 = vector.shape_cast %390 : vector<1x5xi32> to vector<1x1x5xi32>
    %cst_121 = arith.constant dense<0> : vector<1xi32>
    %392 = vector.multi_reduction <add>, %391, %cst_121 [1, 2] : vector<1x1x5xi32> to vector<1xi32>
    %393 = vector.shape_cast %392 : vector<1xi32> to vector<1x1x1xi32>
    %394 = vector.extract %393[0, 0, 0] : i32 from vector<1x1x1xi32>
    %c1_i32_122 = arith.constant 1 : i32
    %395 = arith.subi %384, %c1_i32_122 : i32
    %396 = vector.broadcast %395 : i32 to vector<1x128xi32>
    %397 = arith.cmpi eq, %330, %396 : vector<1x128xi32>
    %398 = vector.broadcast %394 : i32 to vector<1x128xi32>
    %399 = arith.select %397, %398, %383 : vector<1x128xi1>, vector<1x128xi32>
    %c4_i32_123 = arith.constant 4 : i32
    %c7_i32_124 = arith.constant 7 : i32
    %400 = arith.subi %c7_i32_124, %c4_i32_123 : i32
    %401 = arith.index_cast %400 : i32 to index
    %c0_125 = arith.constant 0 : index
    %402 = vector.load %arg8[%401, %c0_125] : memref<8x5xi32, #tpu.memory_space<vmem>>, vector<1x5xi32>
    %403 = vector.broadcast %394 : i32 to vector<1x5xi32>
    %404 = arith.cmpi eq, %222, %403 : vector<1x5xi32>
    %c0_i32_126 = arith.constant 0 : i32
    %405 = vector.broadcast %c0_i32_126 : i32 to vector<1x5xi32>
    %406 = arith.select %404, %402, %405 : vector<1x5xi1>, vector<1x5xi32>
    %407 = vector.shape_cast %406 : vector<1x5xi32> to vector<1x1x5xi32>
    %cst_127 = arith.constant dense<0> : vector<1xi32>
    %408 = vector.multi_reduction <add>, %407, %cst_127 [1, 2] : vector<1x1x5xi32> to vector<1xi32>
    %409 = vector.shape_cast %408 : vector<1xi32> to vector<1x1x1xi32>
    %410 = vector.extract %409[0, 0, 0] : i32 from vector<1x1x1xi32>
    %c1_i32_128 = arith.constant 1 : i32
    %411 = arith.subi %400, %c1_i32_128 : i32
    %412 = vector.broadcast %411 : i32 to vector<1x128xi32>
    %413 = arith.cmpi eq, %330, %412 : vector<1x128xi32>
    %414 = vector.broadcast %410 : i32 to vector<1x128xi32>
    %415 = arith.select %413, %414, %399 : vector<1x128xi1>, vector<1x128xi32>
    %c5_i32_129 = arith.constant 5 : i32
    %c7_i32_130 = arith.constant 7 : i32
    %416 = arith.subi %c7_i32_130, %c5_i32_129 : i32
    %417 = arith.index_cast %416 : i32 to index
    %c0_131 = arith.constant 0 : index
    %418 = vector.load %arg8[%417, %c0_131] : memref<8x5xi32, #tpu.memory_space<vmem>>, vector<1x5xi32>
    %419 = vector.broadcast %410 : i32 to vector<1x5xi32>
    %420 = arith.cmpi eq, %222, %419 : vector<1x5xi32>
    %c0_i32_132 = arith.constant 0 : i32
    %421 = vector.broadcast %c0_i32_132 : i32 to vector<1x5xi32>
    %422 = arith.select %420, %418, %421 : vector<1x5xi1>, vector<1x5xi32>
    %423 = vector.shape_cast %422 : vector<1x5xi32> to vector<1x1x5xi32>
    %cst_133 = arith.constant dense<0> : vector<1xi32>
    %424 = vector.multi_reduction <add>, %423, %cst_133 [1, 2] : vector<1x1x5xi32> to vector<1xi32>
    %425 = vector.shape_cast %424 : vector<1xi32> to vector<1x1x1xi32>
    %426 = vector.extract %425[0, 0, 0] : i32 from vector<1x1x1xi32>
    %c1_i32_134 = arith.constant 1 : i32
    %427 = arith.subi %416, %c1_i32_134 : i32
    %428 = vector.broadcast %427 : i32 to vector<1x128xi32>
    %429 = arith.cmpi eq, %330, %428 : vector<1x128xi32>
    %430 = vector.broadcast %426 : i32 to vector<1x128xi32>
    %431 = arith.select %429, %430, %415 : vector<1x128xi1>, vector<1x128xi32>
    %c6_i32_135 = arith.constant 6 : i32
    %c7_i32_136 = arith.constant 7 : i32
    %432 = arith.subi %c7_i32_136, %c6_i32_135 : i32
    %433 = arith.index_cast %432 : i32 to index
    %c0_137 = arith.constant 0 : index
    %434 = vector.load %arg8[%433, %c0_137] : memref<8x5xi32, #tpu.memory_space<vmem>>, vector<1x5xi32>
    %435 = vector.broadcast %426 : i32 to vector<1x5xi32>
    %436 = arith.cmpi eq, %222, %435 : vector<1x5xi32>
    %c0_i32_138 = arith.constant 0 : i32
    %437 = vector.broadcast %c0_i32_138 : i32 to vector<1x5xi32>
    %438 = arith.select %436, %434, %437 : vector<1x5xi1>, vector<1x5xi32>
    %439 = vector.shape_cast %438 : vector<1x5xi32> to vector<1x1x5xi32>
    %cst_139 = arith.constant dense<0> : vector<1xi32>
    %440 = vector.multi_reduction <add>, %439, %cst_139 [1, 2] : vector<1x1x5xi32> to vector<1xi32>
    %441 = vector.shape_cast %440 : vector<1xi32> to vector<1x1x1xi32>
    %442 = vector.extract %441[0, 0, 0] : i32 from vector<1x1x1xi32>
    %c1_i32_140 = arith.constant 1 : i32
    %443 = arith.subi %432, %c1_i32_140 : i32
    %444 = vector.broadcast %443 : i32 to vector<1x128xi32>
    %445 = arith.cmpi eq, %330, %444 : vector<1x128xi32>
    %446 = vector.broadcast %442 : i32 to vector<1x128xi32>
    %447 = arith.select %445, %446, %431 : vector<1x128xi1>, vector<1x128xi32>
    %c7_i32_141 = arith.constant 7 : i32
    %c7_i32_142 = arith.constant 7 : i32
    %448 = arith.subi %c7_i32_142, %c7_i32_141 : i32
    %449 = arith.index_cast %448 : i32 to index
    %c0_143 = arith.constant 0 : index
    %450 = vector.load %arg8[%449, %c0_143] : memref<8x5xi32, #tpu.memory_space<vmem>>, vector<1x5xi32>
    %451 = vector.broadcast %442 : i32 to vector<1x5xi32>
    %452 = arith.cmpi eq, %222, %451 : vector<1x5xi32>
    %c0_i32_144 = arith.constant 0 : i32
    %453 = vector.broadcast %c0_i32_144 : i32 to vector<1x5xi32>
    %454 = arith.select %452, %450, %453 : vector<1x5xi1>, vector<1x5xi32>
    %455 = vector.shape_cast %454 : vector<1x5xi32> to vector<1x1x5xi32>
    %cst_145 = arith.constant dense<0> : vector<1xi32>
    %456 = vector.multi_reduction <add>, %455, %cst_145 [1, 2] : vector<1x1x5xi32> to vector<1xi32>
    %457 = vector.shape_cast %456 : vector<1xi32> to vector<1x1x1xi32>
    %458 = vector.extract %457[0, 0, 0] : i32 from vector<1x1x1xi32>
    %c1_i32_146 = arith.constant 1 : i32
    %459 = arith.subi %448, %c1_i32_146 : i32
    %460 = vector.broadcast %459 : i32 to vector<1x128xi32>
    %461 = arith.cmpi eq, %330, %460 : vector<1x128xi32>
    %462 = vector.broadcast %458 : i32 to vector<1x128xi32>
    %463 = arith.select %461, %462, %447 : vector<1x128xi1>, vector<1x128xi32>
    %c8_i32_147 = arith.constant 8 : i32
    %464 = vector.broadcast %321 : f32 to vector<1x128xf32>
    %465 = tpu.bitcast %464 : vector<1x128xf32> -> vector<1x128xi32>
    %c126_i32 = arith.constant 126 : i32
    %466 = vector.broadcast %c126_i32 : i32 to vector<1x128xi32>
    %467 = arith.cmpi eq, %330, %466 : vector<1x128xi32>
    %468 = vector.broadcast %458 : i32 to vector<1x128xi32>
    %469 = arith.select %467, %468, %463 : vector<1x128xi1>, vector<1x128xi32>
    %c127_i32 = arith.constant 127 : i32
    %470 = vector.broadcast %c127_i32 : i32 to vector<1x128xi32>
    %471 = arith.cmpi eq, %330, %470 : vector<1x128xi32>
    %472 = arith.select %471, %465, %469 : vector<1x128xi1>, vector<1x128xi32>
    %c0_148 = arith.constant 0 : index
    %c0_149 = arith.constant 0 : index
    %473 = vector.load %arg4[%c0_148, %c0_149] : memref<1x128xi32, #tpu.memory_space<vmem>>, vector<1x128xi32>
    tpu.vector_store %arg4[%c0_148, %c0_149], %472 {strides = array<i32>} : memref<1x128xi32, #tpu.memory_space<vmem>>, vector<1x128xi32>,
    return
  }
}

</mosaic_0001>

<llo_original>
// kernel: tpu_custom_call.1
$region0: #{tpu_custom_call.1}
  #allocation0 [shape = 'u32[]', space=smem, size = 0x4, offset = 0x4, fixed_abs, tag = 'smem constant byte address 0x4 - core index']
  #allocation1 [shape = 'u32[144,128]{1,0:T(1,128)}', space=vmem, size = 0x12000, scoped, tag = 'internal scratch']
  #allocation2 [shape = 'f32[8,128]{1,0:T(8,128)}', space=vmem, size = 0x1000, scoped, tag = 'scratch operand']
  #allocation3 [shape = 'f32[8,32]{1,0:T(8,128)}', space=vmem, size = 0x1000, scoped, tag = 'scratch operand']
  #allocation4 [shape = 'f32[8,5]{1,0:T(8,128)}', space=vmem, size = 0x1000, scoped, tag = 'scratch operand']
  #allocation5 [shape = 's32[8,5]{1,0:T(8,128)}', space=vmem, size = 0x1000, scoped, tag = 'scratch operand']
  %s0 = inlined_call_operand.vmem [shape: s32[8,2], index: 0, kind: input, shape index: {}]
  %s1 = inlined_call_operand.hbm [shape: f32[104,128], index: 1, kind: input, shape index: {}]
  %s2 = inlined_call_operand.vmem [shape: f32[45,5], index: 2, kind: input, shape index: {}]
  %s3 = inlined_call_operand.vmem [shape: f32[2,32], index: 3, kind: input, shape index: {}]
  %s4 = inlined_call_operand.hbm [shape: s32[1,128], index: 4, kind: output, shape index: {}]
  %s5 = sld [smem:[#allocation0]]
  $region30: #{tpu_custom_call.1} parent=0
    _
  %s7 = ssub.s32 1, %s5
  %s8 = scalar_select 0, %s7, %s5
  $region1: #{tpu_custom_call.1} parent=0
    #allocation6 [shape = 'u8[53248]{0}', space=vmem, size = 0xd000, scoped, tag = 'input window, operand 1, single buffered']
    #allocation7 [shape = 's32[1]{0}', space=sflag, size = 0x4, scoped, tag = 'scoped memory for tpu_custom_call.1']
    #allocation8 [shape = 's32[1]{0}', space=sflag, size = 0x4, scoped, tag = 'scoped memory for tpu_custom_call.1']
    #allocation9 [shape = 'u8[512]{0}', space=vmem, size = 0x400, scoped, tag = 'output window, operand 0, single buffered']
    %9 = vsyncpa [#allocation7], 0
    %10 = vsyncpa [#allocation8], 0
    // Predicated region
    $region2: #{tpu_custom_call.1} parent=1 // pred_check
      _
    $region3: #{tpu_custom_call.1} parent=1 // pred_check_branch
      %12 = sbr.rel (0) target = $region5
    $region4: #{tpu_custom_call.1} parent=1 // pred_region
      _
    $region5: #{tpu_custom_call.1} parent=1 // pred_fallthru
      _
    // Predicated region
    $region6: #{tpu_custom_call.1} parent=1 // pred_check
      _
    $region7: #{tpu_custom_call.1} parent=1 // pred_check_branch
      %14 = sbr.rel (0) target = $region9
    $region8: #{tpu_custom_call.1} parent=1 // pred_region
      %s16 = ssub.s32 1664, 1664
      %17 = vsyncadd [#allocation7], %s16
      %s18 = sshll.u32 [#allocation6], 4
      %s19 = int_to_ptr.vmem [resolvable:$true] %s18
      %24 = dma.hbm_to_vmem [thread:$0]  %s1, 1664, %s19, [#allocation7], 128, 128, 8
    $region9: #{tpu_custom_call.1} parent=1 // pred_fallthru
      _
    // Predicated region
    $region10: #{tpu_custom_call.1} parent=1 // pred_check
      _
    $region11: #{tpu_custom_call.1} parent=1 // pred_check_branch
      %26 = sbr.rel (0) target = $region13
    $region12: #{tpu_custom_call.1} parent=1 // pred_region
      _
    $region13: #{tpu_custom_call.1} parent=1 // pred_fallthru
      _
    // Predicated region
    $region14: #{tpu_custom_call.1} parent=1 // pred_check
      _
    $region15: #{tpu_custom_call.1} parent=1 // pred_check_branch
      %28 = sbr.rel (0) target = $region17
    $region16: #{tpu_custom_call.1} parent=1 // pred_region
      _
    $region17: #{tpu_custom_call.1} parent=1 // pred_fallthru
      _
    // Predicated region
    $region18: #{tpu_custom_call.1} parent=1 // pred_check
      _
    $region19: #{tpu_custom_call.1} parent=1 // pred_check_branch
      %30 = sbr.rel (0) target = $region21
    $region20: #{tpu_custom_call.1} parent=1 // pred_region
      %31 = dma.done [#allocation7], 1664
    $region21: #{tpu_custom_call.1} parent=1 // pred_fallthru
      _
    %v32 = vld [vmem:[#allocation6] sm:$0x1]
    %v33 = vld [vmem:[#allocation6 + $0x8] sm:$0xff]
    %v34 = vld [vmem:[#allocation6 + $0x10] sm:$0xff]
    %v35 = vld [vmem:[#allocation6 + $0x18] sm:$0xff]
    %v36 = vld [vmem:[#allocation6 + $0x20] sm:$0xff]
    %v37 = vld [vmem:[#allocation6 + $0x28] sm:$0xff]
    %v38 = vld [vmem:[#allocation6 + $0x30] sm:$0xff]
    %v39 = vld [vmem:[#allocation6 + $0x38] sm:$0xff]
    %v40 = vld [vmem:[#allocation6 + $0x40] sm:$0xff]
    %v41 = vld [vmem:[#allocation6 + $0x48] sm:$0xff]
    %v42 = vld [vmem:[#allocation6 + $0x50] sm:$0xff]
    %v43 = vld [vmem:[#allocation6 + $0x58] sm:$0xff]
    %v44 = vld [vmem:[#allocation6 + $0x60] sm:$0xff]
    %v45 = vld [vmem:[%s2] sm:$0x1]
    %v46 = vld [vmem:[%s2 + $0x8] sm:$0xff]
    %v47 = vld [vmem:[%s2 + $0x10] sm:$0xff]
    %v48 = vld [vmem:[%s2 + $0x18] sm:$0xff]
    %v49 = vld [vmem:[%s2 + $0x20] sm:$0xff]
    %v50 = vld [vmem:[%s2 + $0x28] sm:$0x1f]
    %v51 = vld [vmem:[%s0] sm:$0xff]
    %v52 = vlaneseq
    %v53 = vand.u32 %v52, 127
    %vm54 = vcmp.lt.s32.totalorder %v53, 32
    %v55 = vadd.s32 %v51, 32
    %56 = vset.pattern.permute.xlu0 0
    %57 = vperm.xlu0 %56, %v51
    %v58 = vpop.permute.xlu0 %57
    %59 = vset.pattern.permute.xlu0 1
    %60 = vperm.xlu0 %59, %v55
    %v61 = vpop.permute.xlu0 %60
    %v62 = vsel %vm54, %v58, %v61
    %vm63 = vcmp.eq.s32.totalorder %v53, %v62
    %v64 = vsel %vm63, 1, 0
    %v65 = vcvt.s32.f32 %v64
    %v66 = vlaneseq
    %v67 = vshrl.u32 %v66, 7
    %v68 = vsub.s32 0, %v67
    %v69 = vrot.slane %v32, %v68
    %vm70 = vcmask 523264
    %v72 = vsel %vm70, %v65, 0
    %74 = vmatprep.subr.mxu0 0.0
    %75 = vmatpush1.msra.mxu0 %v37
    %76 = vmatprep.subr.mxu0 0.0
    %77 = vmatpush1.msra.mxu0 %v38
    %78 = vmatprep.subr.mxu0 0.0
    %79 = vmatpush1.msra.mxu0 %v39
    %80 = vmatprep.subr.mxu0 0.0
    %81 = vmatpush1.msra.mxu0 %v40
    %82 = vmatprep.subr.mxu0 0.0
    %83 = vmatpush1.msra.mxu0 %v41
    %84 = vmatprep.subr.mxu0 0.0
    %85 = vmatpush1.msra.mxu0 %v42
    %86 = vmatprep.subr.mxu0 0.0
    %87 = vmatpush1.msra.mxu0 %v43
    %88 = vmatprep.subr.mxu0 0.0
    %89 = vmatpush1.msra.mxu0 %v44
    %90 = vmatprep.subr.mxu0 0.0
    %91 = vmatpush1.msra.mxu0 0.0
    %92 = vmatprep.subr.mxu0 0.0
    %93 = vmatpush1.msra.mxu0 0.0
    %94 = vmatprep.subr.mxu0 0.0
    %95 = vmatpush1.msra.mxu0 0.0
    %96 = vmatprep.subr.mxu0 0.0
    %97 = vmatpush1.msra.mxu0 0.0
    %98 = vmatprep.subr.mxu0 0.0
    %99 = vmatpush1.msra.mxu0 0.0
    %100 = vmatprep.subr.mxu0 0.0
    %101 = vmatpush1.msra.mxu0 0.0
    %102 = vmatprep.subr.mxu0 0.0
    %103 = vmatpush1.msra.mxu0 0.0
    %104 = vmatprep.subr.mxu0 0.0
    %105 = vmatpush1.msra.mxu0 0.0
    %106 = vmatprep.subr.mxu0 0.0
    %107 = vmatpush1.msra.mxu0 0.0
    %108 = vmatprep.subr.mxu0 0.0
    %109 = vmatpush1.msra.mxu0 0.0
    %110 = vmatprep.subr.mxu0 0.0
    %111 = vmatpush1.msra.mxu0 0.0
    %112 = vmatprep.subr.mxu0 0.0
    %113 = vmatpush1.msra.mxu0 0.0
    %114 = vmatprep.subr.mxu0 0.0
    %115 = vmatpush1.msra.mxu0 0.0
    %116 = vmatprep.subr.mxu0 0.0
    %117 = vmatpush1.msra.mxu0 0.0
    %118 = vmatprep.subr.mxu0 0.0
    %119 = vmatpush1.msra.mxu0 0.0
    %120 = vmatprep.subr.mxu0 0.0
    %121 = vmatpush1.msra.mxu0 0.0
    %122 = vmatprep.subr.mxu0 0.0
    %123 = vmatpush1.msra.mxu0 0.0
    %124 = vmatprep.subr.mxu0 0.0
    %125 = vmatpush1.msra.mxu0 0.0
    %126 = vmatprep.subr.mxu0 0.0
    %127 = vmatpush1.msra.mxu0 0.0
    %128 = vmatprep.subr.mxu0 0.0
    %129 = vmatpush1.msra.mxu0 0.0
    %130 = vmatprep.subr.mxu0 0.0
    %131 = vmatpush1.msra.mxu0 0.0
    %132 = vmatprep.subr.mxu0 0.0
    %133 = vmatpush1.msra.mxu0 0.0
    %134 = vmatprep.subr.mxu0 0.0
    %135 = vmatpush1.msra.mxu0 0.0
    %136 = vmatprep.subr.mxu0 0.0
    %137 = vmatpush1.msra.mxu0 0.0
    %138 = vmatprep.mubr.f32.mxu0 0.0
    %139 = vmatmul.mubr.f32.gmra.mrb[0].mxu0 %v72
    %v140 = vpop.f32.mrb[0].mxu0
    %v141 = vadd.f32 %v69, %v140
    %v142 = vpop.f32.mrb[0].mxu0
    %143 = vdwg.mxu0
    %144 = vst [vmem:[#allocation2] sm:$0xff] %v141
    %v145 = vld [vmem:[%s3] sm:$0x1]
    %v146 = vld [vmem:[%s3 + $0x1] sm:$0x1]
    %v147 = vld [vmem:[#allocation2] sm:$0x1]
    %vm148 = vcmask 261120
    %v150 = vsel %vm148, %v145, 0
    %152 = vmatprep.subr.mxu0 0.0
    %153 = vmatpush1.msra.mxu0 %v33
    %154 = vmatprep.subr.mxu0 0.0
    %155 = vmatpush1.msra.mxu0 %v34
    %156 = vmatprep.subr.mxu0 0.0
    %157 = vmatpush1.msra.mxu0 %v35
    %158 = vmatprep.subr.mxu0 0.0
    %159 = vmatpush1.msra.mxu0 %v36
    %160 = vmatprep.subr.mxu0 0.0
    %161 = vmatpush1.msra.mxu0 0.0
    %162 = vmatprep.subr.mxu0 0.0
    %163 = vmatpush1.msra.mxu0 0.0
    %164 = vmatprep.subr.mxu0 0.0
    %165 = vmatpush1.msra.mxu0 0.0
    %166 = vmatprep.subr.mxu0 0.0
    %167 = vmatpush1.msra.mxu0 0.0
    %168 = vmatprep.subr.mxu0 0.0
    %169 = vmatpush1.msra.mxu0 0.0
    %170 = vmatprep.subr.mxu0 0.0
    %171 = vmatpush1.msra.mxu0 0.0
    %172 = vmatprep.subr.mxu0 0.0
    %173 = vmatpush1.msra.mxu0 0.0
    %174 = vmatprep.subr.mxu0 0.0
    %175 = vmatpush1.msra.mxu0 0.0
    %176 = vmatprep.subr.mxu0 0.0
    %177 = vmatpush1.msra.mxu0 0.0
    %178 = vmatprep.subr.mxu0 0.0
    %179 = vmatpush1.msra.mxu0 0.0
    %180 = vmatprep.subr.mxu0 0.0
    %181 = vmatpush1.msra.mxu0 0.0
    %182 = vmatprep.subr.mxu0 0.0
    %183 = vmatpush1.msra.mxu0 0.0
    %184 = vmatprep.subr.mxu0 0.0
    %185 = vmatpush1.msra.mxu0 0.0
    %186 = vmatprep.subr.mxu0 0.0
    %187 = vmatpush1.msra.mxu0 0.0
    %188 = vmatprep.subr.mxu0 0.0
    %189 = vmatpush1.msra.mxu0 0.0
    %190 = vmatprep.subr.mxu0 0.0
    %191 = vmatpush1.msra.mxu0 0.0
    %192 = vmatprep.subr.mxu0 0.0
    %193 = vmatpush1.msra.mxu0 0.0
    %194 = vmatprep.subr.mxu0 0.0
    %195 = vmatpush1.msra.mxu0 0.0
    %196 = vmatprep.subr.mxu0 0.0
    %197 = vmatpush1.msra.mxu0 0.0
    %198 = vmatprep.subr.mxu0 0.0
    %199 = vmatpush1.msra.mxu0 0.0
    %200 = vmatprep.subr.mxu0 0.0
    %201 = vmatpush1.msra.mxu0 0.0
    %202 = vmatprep.subr.mxu0 0.0
    %203 = vmatpush1.msra.mxu0 0.0
    %204 = vmatprep.subr.mxu0 0.0
    %205 = vmatpush1.msra.mxu0 0.0
    %206 = vmatprep.subr.mxu0 0.0
    %207 = vmatpush1.msra.mxu0 0.0
    %208 = vmatprep.subr.mxu0 0.0
    %209 = vmatpush1.msra.mxu0 0.0
    %210 = vmatprep.subr.mxu0 0.0
    %211 = vmatpush1.msra.mxu0 0.0
    %212 = vmatprep.subr.mxu0 0.0
    %213 = vmatpush1.msra.mxu0 0.0
    %214 = vmatprep.subr.mxu0 0.0
    %215 = vmatpush1.msra.mxu0 0.0
    %216 = vmatprep.mubr.f32.mxu0 0.0
    %217 = vmatmul.mubr.f32.gmra.mrb[0].mxu0 %v150
    %v218 = vpop.f32.mrb[0].mxu0
    %v219 = vadd.f32 0.0, %v218
    %v220 = vpop.f32.mrb[0].mxu0
    %221 = vdwg.mxu0
    %v222 = vadd.f32 %v147, %v219
    %v223 = vxor.u32 %v222, 2147483648
    %v224 = vmul.f32 %v223, 1.442695
    %v225 = vpow.pop %v224
    %v226 = vadd.f32 %v225, 1.0
    %v227 = vrcp.pop %v226
    %v228 = vmul.f32 1.0, %v227
    %v229 = vtanh.pop %v222
    %231 = vrot.lane.b32.xlu0 %v146, 32
    %v232 = vpop.permute.xlu0 %231
    %v234 = vmul.f32 %v228, %v232
    %236 = vrot.lane.b32.xlu0 %v229, 32
    %v237 = vpop.permute.xlu0 %236
    %v239 = vmul.f32 %v228, %v237
    %241 = vrot.lane.b32.xlu0 %v239, 32
    %v242 = vpop.permute.xlu0 %241
    %v244 = vadd.f32 %v234, %v242
    %v245 = vtanh.pop %v244
    %247 = vrot.lane.b32.xlu0 %v245, 32
    %v248 = vpop.permute.xlu0 %247
    %v250 = vmul.f32 %v228, %v248
    %252 = vrot.lane.b32.xlu0 %v250, 64
    %v253 = vpop.permute.xlu0 %252
    %vm255 = vcmask 253952
    %256 = vst.msk [vmem:[#allocation3] sm:$0x1] %vm255, %v253
    %v257 = vld [vmem:[#allocation2 + $0x1] sm:$0x1]
    %v258 = vsel %vm148, %v253, 0
    %260 = vmatprep.subr.mxu0 0.0
    %261 = vmatpush1.msra.mxu0 %v33
    %262 = vmatprep.subr.mxu0 0.0
    %263 = vmatpush1.msra.mxu0 %v34
    %264 = vmatprep.subr.mxu0 0.0
    %265 = vmatpush1.msra.mxu0 %v35
    %266 = vmatprep.subr.mxu0 0.0
    %267 = vmatpush1.msra.mxu0 %v36
    %268 = vmatprep.subr.mxu0 0.0
    %269 = vmatpush1.msra.mxu0 0.0
    %270 = vmatprep.subr.mxu0 0.0
    %271 = vmatpush1.msra.mxu0 0.0
    %272 = vmatprep.subr.mxu0 0.0
    %273 = vmatpush1.msra.mxu0 0.0
    %274 = vmatprep.subr.mxu0 0.0
    %275 = vmatpush1.msra.mxu0 0.0
    %276 = vmatprep.subr.mxu0 0.0
    %277 = vmatpush1.msra.mxu0 0.0
    %278 = vmatprep.subr.mxu0 0.0
    %279 = vmatpush1.msra.mxu0 0.0
    %280 = vmatprep.subr.mxu0 0.0
    %281 = vmatpush1.msra.mxu0 0.0
    %282 = vmatprep.subr.mxu0 0.0
    %283 = vmatpush1.msra.mxu0 0.0
    %284 = vmatprep.subr.mxu0 0.0
    %285 = vmatpush1.msra.mxu0 0.0
    %286 = vmatprep.subr.mxu0 0.0
    %287 = vmatpush1.msra.mxu0 0.0
    %288 = vmatprep.subr.mxu0 0.0
    %289 = vmatpush1.msra.mxu0 0.0
    %290 = vmatprep.subr.mxu0 0.0
    %291 = vmatpush1.msra.mxu0 0.0
    %292 = vmatprep.subr.mxu0 0.0
    %293 = vmatpush1.msra.mxu0 0.0
    %294 = vmatprep.subr.mxu0 0.0
    %295 = vmatpush1.msra.mxu0 0.0
    %296 = vmatprep.subr.mxu0 0.0
    %297 = vmatpush1.msra.mxu0 0.0
    %298 = vmatprep.subr.mxu0 0.0
    %299 = vmatpush1.msra.mxu0 0.0
    %300 = vmatprep.subr.mxu0 0.0
    %301 = vmatpush1.msra.mxu0 0.0
    %302 = vmatprep.subr.mxu0 0.0
    %303 = vmatpush1.msra.mxu0 0.0
    %304 = vmatprep.subr.mxu0 0.0
    %305 = vmatpush1.msra.mxu0 0.0
    %306 = vmatprep.subr.mxu0 0.0
    %307 = vmatpush1.msra.mxu0 0.0
    %308 = vmatprep.subr.mxu0 0.0
    %309 = vmatpush1.msra.mxu0 0.0
    %310 = vmatprep.subr.mxu0 0.0
    %311 = vmatpush1.msra.mxu0 0.0
    %312 = vmatprep.subr.mxu0 0.0
    %313 = vmatpush1.msra.mxu0 0.0
    %314 = vmatprep.subr.mxu0 0.0
    %315 = vmatpush1.msra.mxu0 0.0
    %316 = vmatprep.subr.mxu0 0.0
    %317 = vmatpush1.msra.mxu0 0.0
    %318 = vmatprep.subr.mxu0 0.0
    %319 = vmatpush1.msra.mxu0 0.0
    %320 = vmatprep.subr.mxu0 0.0
    %321 = vmatpush1.msra.mxu0 0.0
    %322 = vmatprep.subr.mxu0 0.0
    %323 = vmatpush1.msra.mxu0 0.0
    %324 = vmatprep.mubr.f32.mxu0 0.0
    %325 = vmatmul.mubr.f32.gmra.mrb[0].mxu0 %v258
    %v326 = vpop.f32.mrb[0].mxu0
    %v327 = vadd.f32 0.0, %v326
    %v328 = vpop.f32.mrb[0].mxu0
    %329 = vdwg.mxu0
    %v330 = vadd.f32 %v257, %v327
    %v331 = vxor.u32 %v330, 2147483648
    %v332 = vmul.f32 %v331, 1.442695
    %v333 = vpow.pop %v332
    %v334 = vadd.f32 %v333, 1.0
    %v335 = vrcp.pop %v334
    %v336 = vmul.f32 1.0, %v335
    %v337 = vtanh.pop %v330
    %v338 = vmul.f32 %v336, %v244
    %340 = vrot.lane.b32.xlu0 %v337, 32
    %v341 = vpop.permute.xlu0 %340
    %v343 = vmul.f32 %v336, %v341
    %345 = vrot.lane.b32.xlu0 %v343, 32
    %v346 = vpop.permute.xlu0 %345
    %v348 = vadd.f32 %v338, %v346
    %v349 = vtanh.pop %v348
    %351 = vrot.lane.b32.xlu0 %v349, 32
    %v352 = vpop.permute.xlu0 %351
    %v354 = vmul.f32 %v336, %v352
    %356 = vrot.lane.b32.xlu0 %v354, 64
    %v357 = vpop.permute.xlu0 %356
    %359 = vst.msk [vmem:[#allocation3 + $0x1] sm:$0x1] %vm255, %v357
    %v360 = vld [vmem:[#allocation2 + $0x2] sm:$0x1]
    %v361 = vsel %vm148, %v357, 0
    %363 = vmatprep.subr.mxu0 0.0
    %364 = vmatpush1.msra.mxu0 %v33
    %365 = vmatprep.subr.mxu0 0.0
    %366 = vmatpush1.msra.mxu0 %v34
    %367 = vmatprep.subr.mxu0 0.0
    %368 = vmatpush1.msra.mxu0 %v35
    %369 = vmatprep.subr.mxu0 0.0
    %370 = vmatpush1.msra.mxu0 %v36
    %371 = vmatprep.subr.mxu0 0.0
    %372 = vmatpush1.msra.mxu0 0.0
    %373 = vmatprep.subr.mxu0 0.0
    %374 = vmatpush1.msra.mxu0 0.0
    %375 = vmatprep.subr.mxu0 0.0
    %376 = vmatpush1.msra.mxu0 0.0
    %377 = vmatprep.subr.mxu0 0.0
    %378 = vmatpush1.msra.mxu0 0.0
    %379 = vmatprep.subr.mxu0 0.0
    %380 = vmatpush1.msra.mxu0 0.0
    %381 = vmatprep.subr.mxu0 0.0
    %382 = vmatpush1.msra.mxu0 0.0
    %383 = vmatprep.subr.mxu0 0.0
    %384 = vmatpush1.msra.mxu0 0.0
    %385 = vmatprep.subr.mxu0 0.0
    %386 = vmatpush1.msra.mxu0 0.0
    %387 = vmatprep.subr.mxu0 0.0
    %388 = vmatpush1.msra.mxu0 0.0
    %389 = vmatprep.subr.mxu0 0.0
    %390 = vmatpush1.msra.mxu0 0.0
    %391 = vmatprep.subr.mxu0 0.0
    %392 = vmatpush1.msra.mxu0 0.0
    %393 = vmatprep.subr.mxu0 0.0
    %394 = vmatpush1.msra.mxu0 0.0
    %395 = vmatprep.subr.mxu0 0.0
    %396 = vmatpush1.msra.mxu0 0.0
    %397 = vmatprep.subr.mxu0 0.0
    %398 = vmatpush1.msra.mxu0 0.0
    %399 = vmatprep.subr.mxu0 0.0
    %400 = vmatpush1.msra.mxu0 0.0
    %401 = vmatprep.subr.mxu0 0.0
    %402 = vmatpush1.msra.mxu0 0.0
    %403 = vmatprep.subr.mxu0 0.0
    %404 = vmatpush1.msra.mxu0 0.0
    %405 = vmatprep.subr.mxu0 0.0
    %406 = vmatpush1.msra.mxu0 0.0
    %407 = vmatprep.subr.mxu0 0.0
    %408 = vmatpush1.msra.mxu0 0.0
    %409 = vmatprep.subr.mxu0 0.0
    %410 = vmatpush1.msra.mxu0 0.0
    %411 = vmatprep.subr.mxu0 0.0
    %412 = vmatpush1.msra.mxu0 0.0
    %413 = vmatprep.subr.mxu0 0.0
    %414 = vmatpush1.msra.mxu0 0.0
    %415 = vmatprep.subr.mxu0 0.0
    %416 = vmatpush1.msra.mxu0 0.0
    %417 = vmatprep.subr.mxu0 0.0
    %418 = vmatpush1.msra.mxu0 0.0
    %419 = vmatprep.subr.mxu0 0.0
    %420 = vmatpush1.msra.mxu0 0.0
    %421 = vmatprep.subr.mxu0 0.0
    %422 = vmatpush1.msra.mxu0 0.0
    %423 = vmatprep.subr.mxu0 0.0
    %424 = vmatpush1.msra.mxu0 0.0
    %425 = vmatprep.subr.mxu0 0.0
    %426 = vmatpush1.msra.mxu0 0.0
    %427 = vmatprep.mubr.f32.mxu0 0.0
    %428 = vmatmul.mubr.f32.gmra.mrb[0].mxu0 %v361
    %v429 = vpop.f32.mrb[0].mxu0
    %v430 = vadd.f32 0.0, %v429
    %v431 = vpop.f32.mrb[0].mxu0
    %432 = vdwg.mxu0
    %v433 = vadd.f32 %v360, %v430
    %v434 = vxor.u32 %v433, 2147483648
    %v435 = vmul.f32 %v434, 1.442695
    %v436 = vpow.pop %v435
    %v437 = vadd.f32 %v436, 1.0
    %v438 = vrcp.pop %v437
    %v439 = vmul.f32 1.0, %v438
    %v440 = vtanh.pop %v433
    %v441 = vmul.f32 %v439, %v348
    %443 = vrot.lane.b32.xlu0 %v440, 32
    %v444 = vpop.permute.xlu0 %443
    %v446 = vmul.f32 %v439, %v444
    %448 = vrot.lane.b32.xlu0 %v446, 32
    %v449 = vpop.permute.xlu0 %448
    %v451 = vadd.f32 %v441, %v449
    %v452 = vtanh.pop %v451
    %454 = vrot.lane.b32.xlu0 %v452, 32
    %v455 = vpop.permute.xlu0 %454
    %v457 = vmul.f32 %v439, %v455
    %459 = vrot.lane.b32.xlu0 %v457, 64
    %v460 = vpop.permute.xlu0 %459
    %462 = vst.msk [vmem:[#allocation3 + $0x2] sm:$0x1] %vm255, %v460
    %v463 = vld [vmem:[#allocation2 + $0x3] sm:$0x1]
    %v464 = vsel %vm148, %v460, 0
    %466 = vmatprep.subr.mxu0 0.0
    %467 = vmatpush1.msra.mxu0 %v33
    %468 = vmatprep.subr.mxu0 0.0
    %469 = vmatpush1.msra.mxu0 %v34
    %470 = vmatprep.subr.mxu0 0.0
    %471 = vmatpush1.msra.mxu0 %v35
    %472 = vmatprep.subr.mxu0 0.0
    %473 = vmatpush1.msra.mxu0 %v36
    %474 = vmatprep.subr.mxu0 0.0
    %475 = vmatpush1.msra.mxu0 0.0
    %476 = vmatprep.subr.mxu0 0.0
    %477 = vmatpush1.msra.mxu0 0.0
    %478 = vmatprep.subr.mxu0 0.0
    %479 = vmatpush1.msra.mxu0 0.0
    %480 = vmatprep.subr.mxu0 0.0
    %481 = vmatpush1.msra.mxu0 0.0
    %482 = vmatprep.subr.mxu0 0.0
    %483 = vmatpush1.msra.mxu0 0.0
    %484 = vmatprep.subr.mxu0 0.0
    %485 = vmatpush1.msra.mxu0 0.0
    %486 = vmatprep.subr.mxu0 0.0
    %487 = vmatpush1.msra.mxu0 0.0
    %488 = vmatprep.subr.mxu0 0.0
    %489 = vmatpush1.msra.mxu0 0.0
    %490 = vmatprep.subr.mxu0 0.0
    %491 = vmatpush1.msra.mxu0 0.0
    %492 = vmatprep.subr.mxu0 0.0
    %493 = vmatpush1.msra.mxu0 0.0
    %494 = vmatprep.subr.mxu0 0.0
    %495 = vmatpush1.msra.mxu0 0.0
    %496 = vmatprep.subr.mxu0 0.0
    %497 = vmatpush1.msra.mxu0 0.0
    %498 = vmatprep.subr.mxu0 0.0
    %499 = vmatpush1.msra.mxu0 0.0
    %500 = vmatprep.subr.mxu0 0.0
    %501 = vmatpush1.msra.mxu0 0.0
    %502 = vmatprep.subr.mxu0 0.0
    %503 = vmatpush1.msra.mxu0 0.0
    %504 = vmatprep.subr.mxu0 0.0
    %505 = vmatpush1.msra.mxu0 0.0
    %506 = vmatprep.subr.mxu0 0.0
    %507 = vmatpush1.msra.mxu0 0.0
    %508 = vmatprep.subr.mxu0 0.0
    %509 = vmatpush1.msra.mxu0 0.0
    %510 = vmatprep.subr.mxu0 0.0
    %511 = vmatpush1.msra.mxu0 0.0
    %512 = vmatprep.subr.mxu0 0.0
    %513 = vmatpush1.msra.mxu0 0.0
    %514 = vmatprep.subr.mxu0 0.0
    %515 = vmatpush1.msra.mxu0 0.0
    %516 = vmatprep.subr.mxu0 0.0
    %517 = vmatpush1.msra.mxu0 0.0
    %518 = vmatprep.subr.mxu0 0.0
    %519 = vmatpush1.msra.mxu0 0.0
    %520 = vmatprep.subr.mxu0 0.0
    %521 = vmatpush1.msra.mxu0 0.0
    %522 = vmatprep.subr.mxu0 0.0
    %523 = vmatpush1.msra.mxu0 0.0
    %524 = vmatprep.subr.mxu0 0.0
    %525 = vmatpush1.msra.mxu0 0.0
    %526 = vmatprep.subr.mxu0 0.0
    %527 = vmatpush1.msra.mxu0 0.0
    %528 = vmatprep.subr.mxu0 0.0
    %529 = vmatpush1.msra.mxu0 0.0
    %530 = vmatprep.mubr.f32.mxu0 0.0
    %531 = vmatmul.mubr.f32.gmra.mrb[0].mxu0 %v464
    %v532 = vpop.f32.mrb[0].mxu0
    %v533 = vadd.f32 0.0, %v532
    %v534 = vpop.f32.mrb[0].mxu0
    %535 = vdwg.mxu0
    %v536 = vadd.f32 %v463, %v533
    %v537 = vxor.u32 %v536, 2147483648
    %v538 = vmul.f32 %v537, 1.442695
    %v539 = vpow.pop %v538
    %v540 = vadd.f32 %v539, 1.0
    %v541 = vrcp.pop %v540
    %v542 = vmul.f32 1.0, %v541
    %v543 = vtanh.pop %v536
    %v544 = vmul.f32 %v542, %v451
    %546 = vrot.lane.b32.xlu0 %v543, 32
    %v547 = vpop.permute.xlu0 %546
    %v549 = vmul.f32 %v542, %v547
    %551 = vrot.lane.b32.xlu0 %v549, 32
    %v552 = vpop.permute.xlu0 %551
    %v554 = vadd.f32 %v544, %v552
    %v555 = vtanh.pop %v554
    %557 = vrot.lane.b32.xlu0 %v555, 32
    %v558 = vpop.permute.xlu0 %557
    %v560 = vmul.f32 %v542, %v558
    %562 = vrot.lane.b32.xlu0 %v560, 64
    %v563 = vpop.permute.xlu0 %562
    %565 = vst.msk [vmem:[#allocation3 + $0x3] sm:$0x1] %vm255, %v563
    %v566 = vld [vmem:[#allocation2 + $0x4] sm:$0x1]
    %v567 = vsel %vm148, %v563, 0
    %569 = vmatprep.subr.mxu0 0.0
    %570 = vmatpush1.msra.mxu0 %v33
    %571 = vmatprep.subr.mxu0 0.0
    %572 = vmatpush1.msra.mxu0 %v34
    %573 = vmatprep.subr.mxu0 0.0
    %574 = vmatpush1.msra.mxu0 %v35
    %575 = vmatprep.subr.mxu0 0.0
    %576 = vmatpush1.msra.mxu0 %v36
    %577 = vmatprep.subr.mxu0 0.0
    %578 = vmatpush1.msra.mxu0 0.0
    %579 = vmatprep.subr.mxu0 0.0
    %580 = vmatpush1.msra.mxu0 0.0
    %581 = vmatprep.subr.mxu0 0.0
    %582 = vmatpush1.msra.mxu0 0.0
    %583 = vmatprep.subr.mxu0 0.0
    %584 = vmatpush1.msra.mxu0 0.0
    %585 = vmatprep.subr.mxu0 0.0
    %586 = vmatpush1.msra.mxu0 0.0
    %587 = vmatprep.subr.mxu0 0.0
    %588 = vmatpush1.msra.mxu0 0.0
    %589 = vmatprep.subr.mxu0 0.0
    %590 = vmatpush1.msra.mxu0 0.0
    %591 = vmatprep.subr.mxu0 0.0
    %592 = vmatpush1.msra.mxu0 0.0
    %593 = vmatprep.subr.mxu0 0.0
    %594 = vmatpush1.msra.mxu0 0.0
    %595 = vmatprep.subr.mxu0 0.0
    %596 = vmatpush1.msra.mxu0 0.0
    %597 = vmatprep.subr.mxu0 0.0
    %598 = vmatpush1.msra.mxu0 0.0
    %599 = vmatprep.subr.mxu0 0.0
    %600 = vmatpush1.msra.mxu0 0.0
    %601 = vmatprep.subr.mxu0 0.0
    %602 = vmatpush1.msra.mxu0 0.0
    %603 = vmatprep.subr.mxu0 0.0
    %604 = vmatpush1.msra.mxu0 0.0
    %605 = vmatprep.subr.mxu0 0.0
    %606 = vmatpush1.msra.mxu0 0.0
    %607 = vmatprep.subr.mxu0 0.0
    %608 = vmatpush1.msra.mxu0 0.0
    %609 = vmatprep.subr.mxu0 0.0
    %610 = vmatpush1.msra.mxu0 0.0
    %611 = vmatprep.subr.mxu0 0.0
    %612 = vmatpush1.msra.mxu0 0.0
    %613 = vmatprep.subr.mxu0 0.0
    %614 = vmatpush1.msra.mxu0 0.0
    %615 = vmatprep.subr.mxu0 0.0
    %616 = vmatpush1.msra.mxu0 0.0
    %617 = vmatprep.subr.mxu0 0.0
    %618 = vmatpush1.msra.mxu0 0.0
    %619 = vmatprep.subr.mxu0 0.0
    %620 = vmatpush1.msra.mxu0 0.0
    %621 = vmatprep.subr.mxu0 0.0
    %622 = vmatpush1.msra.mxu0 0.0
    %623 = vmatprep.subr.mxu0 0.0
    %624 = vmatpush1.msra.mxu0 0.0
    %625 = vmatprep.subr.mxu0 0.0
    %626 = vmatpush1.msra.mxu0 0.0
    %627 = vmatprep.subr.mxu0 0.0
    %628 = vmatpush1.msra.mxu0 0.0
    %629 = vmatprep.subr.mxu0 0.0
    %630 = vmatpush1.msra.mxu0 0.0
    %631 = vmatprep.subr.mxu0 0.0
    %632 = vmatpush1.msra.mxu0 0.0
    %633 = vmatprep.mubr.f32.mxu0 0.0
    %634 = vmatmul.mubr.f32.gmra.mrb[0].mxu0 %v567
    %v635 = vpop.f32.mrb[0].mxu0
    %v636 = vadd.f32 0.0, %v635
    %v637 = vpop.f32.mrb[0].mxu0
    %638 = vdwg.mxu0
    %v639 = vadd.f32 %v566, %v636
    %v640 = vxor.u32 %v639, 2147483648
    %v641 = vmul.f32 %v640, 1.442695
    %v642 = vpow.pop %v641
    %v643 = vadd.f32 %v642, 1.0
    %v644 = vrcp.pop %v643
    %v645 = vmul.f32 1.0, %v644
    %v646 = vtanh.pop %v639
    %v647 = vmul.f32 %v645, %v554
    %649 = vrot.lane.b32.xlu0 %v646, 32
    %v650 = vpop.permute.xlu0 %649
    %v652 = vmul.f32 %v645, %v650
    %654 = vrot.lane.b32.xlu0 %v652, 32
    %v655 = vpop.permute.xlu0 %654
    %v657 = vadd.f32 %v647, %v655
    %v658 = vtanh.pop %v657
    %660 = vrot.lane.b32.xlu0 %v658, 32
    %v661 = vpop.permute.xlu0 %660
    %v663 = vmul.f32 %v645, %v661
    %665 = vrot.lane.b32.xlu0 %v663, 64
    %v666 = vpop.permute.xlu0 %665
    %668 = vst.msk [vmem:[#allocation3 + $0x4] sm:$0x1] %vm255, %v666
    %v669 = vld [vmem:[#allocation2 + $0x5] sm:$0x1]
    %v670 = vsel %vm148, %v666, 0
    %672 = vmatprep.subr.mxu0 0.0
    %673 = vmatpush1.msra.mxu0 %v33
    %674 = vmatprep.subr.mxu0 0.0
    %675 = vmatpush1.msra.mxu0 %v34
    %676 = vmatprep.subr.mxu0 0.0
    %677 = vmatpush1.msra.mxu0 %v35
    %678 = vmatprep.subr.mxu0 0.0
    %679 = vmatpush1.msra.mxu0 %v36
    %680 = vmatprep.subr.mxu0 0.0
    %681 = vmatpush1.msra.mxu0 0.0
    %682 = vmatprep.subr.mxu0 0.0
    %683 = vmatpush1.msra.mxu0 0.0
    %684 = vmatprep.subr.mxu0 0.0
    %685 = vmatpush1.msra.mxu0 0.0
    %686 = vmatprep.subr.mxu0 0.0
    %687 = vmatpush1.msra.mxu0 0.0
    %688 = vmatprep.subr.mxu0 0.0
    %689 = vmatpush1.msra.mxu0 0.0
    %690 = vmatprep.subr.mxu0 0.0
    %691 = vmatpush1.msra.mxu0 0.0
    %692 = vmatprep.subr.mxu0 0.0
    %693 = vmatpush1.msra.mxu0 0.0
    %694 = vmatprep.subr.mxu0 0.0
    %695 = vmatpush1.msra.mxu0 0.0
    %696 = vmatprep.subr.mxu0 0.0
    %697 = vmatpush1.msra.mxu0 0.0
    %698 = vmatprep.subr.mxu0 0.0
    %699 = vmatpush1.msra.mxu0 0.0
    %700 = vmatprep.subr.mxu0 0.0
    %701 = vmatpush1.msra.mxu0 0.0
    %702 = vmatprep.subr.mxu0 0.0
    %703 = vmatpush1.msra.mxu0 0.0
    %704 = vmatprep.subr.mxu0 0.0
    %705 = vmatpush1.msra.mxu0 0.0
    %706 = vmatprep.subr.mxu0 0.0
    %707 = vmatpush1.msra.mxu0 0.0
    %708 = vmatprep.subr.mxu0 0.0
    %709 = vmatpush1.msra.mxu0 0.0
    %710 = vmatprep.subr.mxu0 0.0
    %711 = vmatpush1.msra.mxu0 0.0
    %712 = vmatprep.subr.mxu0 0.0
    %713 = vmatpush1.msra.mxu0 0.0
    %714 = vmatprep.subr.mxu0 0.0
    %715 = vmatpush1.msra.mxu0 0.0
    %716 = vmatprep.subr.mxu0 0.0
    %717 = vmatpush1.msra.mxu0 0.0
    %718 = vmatprep.subr.mxu0 0.0
    %719 = vmatpush1.msra.mxu0 0.0
    %720 = vmatprep.subr.mxu0 0.0
    %721 = vmatpush1.msra.mxu0 0.0
    %722 = vmatprep.subr.mxu0 0.0
    %723 = vmatpush1.msra.mxu0 0.0
    %724 = vmatprep.subr.mxu0 0.0
    %725 = vmatpush1.msra.mxu0 0.0
    %726 = vmatprep.subr.mxu0 0.0
    %727 = vmatpush1.msra.mxu0 0.0
    %728 = vmatprep.subr.mxu0 0.0
    %729 = vmatpush1.msra.mxu0 0.0
    %730 = vmatprep.subr.mxu0 0.0
    %731 = vmatpush1.msra.mxu0 0.0
    %732 = vmatprep.subr.mxu0 0.0
    %733 = vmatpush1.msra.mxu0 0.0
    %734 = vmatprep.subr.mxu0 0.0
    %735 = vmatpush1.msra.mxu0 0.0
    %736 = vmatprep.mubr.f32.mxu0 0.0
    %737 = vmatmul.mubr.f32.gmra.mrb[0].mxu0 %v670
    %v738 = vpop.f32.mrb[0].mxu0
    %v739 = vadd.f32 0.0, %v738
    %v740 = vpop.f32.mrb[0].mxu0
    %741 = vdwg.mxu0
    %v742 = vadd.f32 %v669, %v739
    %v743 = vxor.u32 %v742, 2147483648
    %v744 = vmul.f32 %v743, 1.442695
    %v745 = vpow.pop %v744
    %v746 = vadd.f32 %v745, 1.0
    %v747 = vrcp.pop %v746
    %v748 = vmul.f32 1.0, %v747
    %v749 = vtanh.pop %v742
    %v750 = vmul.f32 %v748, %v657
    %752 = vrot.lane.b32.xlu0 %v749, 32
    %v753 = vpop.permute.xlu0 %752
    %v755 = vmul.f32 %v748, %v753
    %757 = vrot.lane.b32.xlu0 %v755, 32
    %v758 = vpop.permute.xlu0 %757
    %v760 = vadd.f32 %v750, %v758
    %v761 = vtanh.pop %v760
    %763 = vrot.lane.b32.xlu0 %v761, 32
    %v764 = vpop.permute.xlu0 %763
    %v766 = vmul.f32 %v748, %v764
    %768 = vrot.lane.b32.xlu0 %v766, 64
    %v769 = vpop.permute.xlu0 %768
    %771 = vst.msk [vmem:[#allocation3 + $0x5] sm:$0x1] %vm255, %v769
    %v772 = vld [vmem:[#allocation2 + $0x6] sm:$0x1]
    %v773 = vsel %vm148, %v769, 0
    %775 = vmatprep.subr.mxu0 0.0
    %776 = vmatpush1.msra.mxu0 %v33
    %777 = vmatprep.subr.mxu0 0.0
    %778 = vmatpush1.msra.mxu0 %v34
    %779 = vmatprep.subr.mxu0 0.0
    %780 = vmatpush1.msra.mxu0 %v35
    %781 = vmatprep.subr.mxu0 0.0
    %782 = vmatpush1.msra.mxu0 %v36
    %783 = vmatprep.subr.mxu0 0.0
    %784 = vmatpush1.msra.mxu0 0.0
    %785 = vmatprep.subr.mxu0 0.0
    %786 = vmatpush1.msra.mxu0 0.0
    %787 = vmatprep.subr.mxu0 0.0
    %788 = vmatpush1.msra.mxu0 0.0
    %789 = vmatprep.subr.mxu0 0.0
    %790 = vmatpush1.msra.mxu0 0.0
    %791 = vmatprep.subr.mxu0 0.0
    %792 = vmatpush1.msra.mxu0 0.0
    %793 = vmatprep.subr.mxu0 0.0
    %794 = vmatpush1.msra.mxu0 0.0
    %795 = vmatprep.subr.mxu0 0.0
    %796 = vmatpush1.msra.mxu0 0.0
    %797 = vmatprep.subr.mxu0 0.0
    %798 = vmatpush1.msra.mxu0 0.0
    %799 = vmatprep.subr.mxu0 0.0
    %800 = vmatpush1.msra.mxu0 0.0
    %801 = vmatprep.subr.mxu0 0.0
    %802 = vmatpush1.msra.mxu0 0.0
    %803 = vmatprep.subr.mxu0 0.0
    %804 = vmatpush1.msra.mxu0 0.0
    %805 = vmatprep.subr.mxu0 0.0
    %806 = vmatpush1.msra.mxu0 0.0
    %807 = vmatprep.subr.mxu0 0.0
    %808 = vmatpush1.msra.mxu0 0.0
    %809 = vmatprep.subr.mxu0 0.0
    %810 = vmatpush1.msra.mxu0 0.0
    %811 = vmatprep.subr.mxu0 0.0
    %812 = vmatpush1.msra.mxu0 0.0
    %813 = vmatprep.subr.mxu0 0.0
    %814 = vmatpush1.msra.mxu0 0.0
    %815 = vmatprep.subr.mxu0 0.0
    %816 = vmatpush1.msra.mxu0 0.0
    %817 = vmatprep.subr.mxu0 0.0
    %818 = vmatpush1.msra.mxu0 0.0
    %819 = vmatprep.subr.mxu0 0.0
    %820 = vmatpush1.msra.mxu0 0.0
    %821 = vmatprep.subr.mxu0 0.0
    %822 = vmatpush1.msra.mxu0 0.0
    %823 = vmatprep.subr.mxu0 0.0
    %824 = vmatpush1.msra.mxu0 0.0
    %825 = vmatprep.subr.mxu0 0.0
    %826 = vmatpush1.msra.mxu0 0.0
    %827 = vmatprep.subr.mxu0 0.0
    %828 = vmatpush1.msra.mxu0 0.0
    %829 = vmatprep.subr.mxu0 0.0
    %830 = vmatpush1.msra.mxu0 0.0
    %831 = vmatprep.subr.mxu0 0.0
    %832 = vmatpush1.msra.mxu0 0.0
    %833 = vmatprep.subr.mxu0 0.0
    %834 = vmatpush1.msra.mxu0 0.0
    %835 = vmatprep.subr.mxu0 0.0
    %836 = vmatpush1.msra.mxu0 0.0
    %837 = vmatprep.subr.mxu0 0.0
    %838 = vmatpush1.msra.mxu0 0.0
    %839 = vmatprep.mubr.f32.mxu0 0.0
    %840 = vmatmul.mubr.f32.gmra.mrb[0].mxu0 %v773
    %v841 = vpop.f32.mrb[0].mxu0
    %v842 = vadd.f32 0.0, %v841
    %v843 = vpop.f32.mrb[0].mxu0
    %844 = vdwg.mxu0
    %v845 = vadd.f32 %v772, %v842
    %v846 = vxor.u32 %v845, 2147483648
    %v847 = vmul.f32 %v846, 1.442695
    %v848 = vpow.pop %v847
    %v849 = vadd.f32 %v848, 1.0
    %v850 = vrcp.pop %v849
    %v851 = vmul.f32 1.0, %v850
    %v852 = vtanh.pop %v845
    %v853 = vmul.f32 %v851, %v760
    %855 = vrot.lane.b32.xlu0 %v852, 32
    %v856 = vpop.permute.xlu0 %855
    %v858 = vmul.f32 %v851, %v856
    %860 = vrot.lane.b32.xlu0 %v858, 32
    %v861 = vpop.permute.xlu0 %860
    %v863 = vadd.f32 %v853, %v861
    %v864 = vtanh.pop %v863
    %866 = vrot.lane.b32.xlu0 %v864, 32
    %v867 = vpop.permute.xlu0 %866
    %v869 = vmul.f32 %v851, %v867
    %871 = vrot.lane.b32.xlu0 %v869, 64
    %v872 = vpop.permute.xlu0 %871
    %874 = vst.msk [vmem:[#allocation3 + $0x6] sm:$0x1] %vm255, %v872
    %v875 = vld [vmem:[#allocation2 + $0x7] sm:$0x1]
    %v876 = vsel %vm148, %v872, 0
    %878 = vmatprep.subr.mxu0 0.0
    %879 = vmatpush1.msra.mxu0 %v33
    %880 = vmatprep.subr.mxu0 0.0
    %881 = vmatpush1.msra.mxu0 %v34
    %882 = vmatprep.subr.mxu0 0.0
    %883 = vmatpush1.msra.mxu0 %v35
    %884 = vmatprep.subr.mxu0 0.0
    %885 = vmatpush1.msra.mxu0 %v36
    %886 = vmatprep.subr.mxu0 0.0
    %887 = vmatpush1.msra.mxu0 0.0
    %888 = vmatprep.subr.mxu0 0.0
    %889 = vmatpush1.msra.mxu0 0.0
    %890 = vmatprep.subr.mxu0 0.0
    %891 = vmatpush1.msra.mxu0 0.0
    %892 = vmatprep.subr.mxu0 0.0
    %893 = vmatpush1.msra.mxu0 0.0
    %894 = vmatprep.subr.mxu0 0.0
    %895 = vmatpush1.msra.mxu0 0.0
    %896 = vmatprep.subr.mxu0 0.0
    %897 = vmatpush1.msra.mxu0 0.0
    %898 = vmatprep.subr.mxu0 0.0
    %899 = vmatpush1.msra.mxu0 0.0
    %900 = vmatprep.subr.mxu0 0.0
    %901 = vmatpush1.msra.mxu0 0.0
    %902 = vmatprep.subr.mxu0 0.0
    %903 = vmatpush1.msra.mxu0 0.0
    %904 = vmatprep.subr.mxu0 0.0
    %905 = vmatpush1.msra.mxu0 0.0
    %906 = vmatprep.subr.mxu0 0.0
    %907 = vmatpush1.msra.mxu0 0.0
    %908 = vmatprep.subr.mxu0 0.0
    %909 = vmatpush1.msra.mxu0 0.0
    %910 = vmatprep.subr.mxu0 0.0
    %911 = vmatpush1.msra.mxu0 0.0
    %912 = vmatprep.subr.mxu0 0.0
    %913 = vmatpush1.msra.mxu0 0.0
    %914 = vmatprep.subr.mxu0 0.0
    %915 = vmatpush1.msra.mxu0 0.0
    %916 = vmatprep.subr.mxu0 0.0
    %917 = vmatpush1.msra.mxu0 0.0
    %918 = vmatprep.subr.mxu0 0.0
    %919 = vmatpush1.msra.mxu0 0.0
    %920 = vmatprep.subr.mxu0 0.0
    %921 = vmatpush1.msra.mxu0 0.0
    %922 = vmatprep.subr.mxu0 0.0
    %923 = vmatpush1.msra.mxu0 0.0
    %924 = vmatprep.subr.mxu0 0.0
    %925 = vmatpush1.msra.mxu0 0.0
    %926 = vmatprep.subr.mxu0 0.0
    %927 = vmatpush1.msra.mxu0 0.0
    %928 = vmatprep.subr.mxu0 0.0
    %929 = vmatpush1.msra.mxu0 0.0
    %930 = vmatprep.subr.mxu0 0.0
    %931 = vmatpush1.msra.mxu0 0.0
    %932 = vmatprep.subr.mxu0 0.0
    %933 = vmatpush1.msra.mxu0 0.0
    %934 = vmatprep.subr.mxu0 0.0
    %935 = vmatpush1.msra.mxu0 0.0
    %936 = vmatprep.subr.mxu0 0.0
    %937 = vmatpush1.msra.mxu0 0.0
    %938 = vmatprep.subr.mxu0 0.0
    %939 = vmatpush1.msra.mxu0 0.0
    %940 = vmatprep.subr.mxu0 0.0
    %941 = vmatpush1.msra.mxu0 0.0
    %942 = vmatprep.mubr.f32.mxu0 0.0
    %943 = vmatmul.mubr.f32.gmra.mrb[0].mxu0 %v876
    %v944 = vpop.f32.mrb[0].mxu0
    %v945 = vadd.f32 0.0, %v944
    %v946 = vpop.f32.mrb[0].mxu0
    %947 = vdwg.mxu0
    %v948 = vadd.f32 %v875, %v945
    %v949 = vxor.u32 %v948, 2147483648
    %v950 = vmul.f32 %v949, 1.442695
    %v951 = vpow.pop %v950
    %v952 = vadd.f32 %v951, 1.0
    %v953 = vrcp.pop %v952
    %v954 = vmul.f32 1.0, %v953
    %v955 = vtanh.pop %v948
    %v956 = vmul.f32 %v954, %v863
    %958 = vrot.lane.b32.xlu0 %v955, 32
    %v959 = vpop.permute.xlu0 %958
    %v961 = vmul.f32 %v954, %v959
    %963 = vrot.lane.b32.xlu0 %v961, 32
    %v964 = vpop.permute.xlu0 %963
    %v966 = vadd.f32 %v956, %v964
    %v967 = vtanh.pop %v966
    %969 = vrot.lane.b32.xlu0 %v967, 32
    %v970 = vpop.permute.xlu0 %969
    %v972 = vmul.f32 %v954, %v970
    %974 = vrot.lane.b32.xlu0 %v972, 64
    %v975 = vpop.permute.xlu0 %974
    %977 = vst.msk [vmem:[#allocation3 + $0x7] sm:$0x1] %vm255, %v975
    %v978 = vld [vmem:[#allocation3] sm:$0xff]
    %v979 = vlaneseq
    %v980 = vshrl.u32 %v979, 7
    %v981 = vadd.s32 %v980, %v53
    %vm982 = vcmp.eq.s32.totalorder %v981, 7
    %v983 = vsel %vm982, 1, 0
    %v984 = vcvt.s32.f32 %v983
    %986 = vrot.lane.b32.xlu0 %v978, 112
    %v987 = vpop.permute.xlu0 %986
    %vm989 = vcmask 64512
    %v991 = vsel %vm989, %v984, 0
    %993 = vmatprep.subr.mxu0 0.0
    %994 = vmatpush1.msra.mxu0 %v987
    %995 = vmatprep.subr.mxu0 0.0
    %996 = vmatpush1.msra.mxu0 0.0
    %997 = vmatprep.subr.mxu0 0.0
    %998 = vmatpush1.msra.mxu0 0.0
    %999 = vmatprep.subr.mxu0 0.0
    %1000 = vmatpush1.msra.mxu0 0.0
    %1001 = vmatprep.subr.mxu0 0.0
    %1002 = vmatpush1.msra.mxu0 0.0
    %1003 = vmatprep.subr.mxu0 0.0
    %1004 = vmatpush1.msra.mxu0 0.0
    %1005 = vmatprep.subr.mxu0 0.0
    %1006 = vmatpush1.msra.mxu0 0.0
    %1007 = vmatprep.subr.mxu0 0.0
    %1008 = vmatpush1.msra.mxu0 0.0
    %1009 = vmatprep.subr.mxu0 0.0
    %1010 = vmatpush1.msra.mxu0 0.0
    %1011 = vmatprep.subr.mxu0 0.0
    %1012 = vmatpush1.msra.mxu0 0.0
    %1013 = vmatprep.subr.mxu0 0.0
    %1014 = vmatpush1.msra.mxu0 0.0
    %1015 = vmatprep.subr.mxu0 0.0
    %1016 = vmatpush1.msra.mxu0 0.0
    %1017 = vmatprep.subr.mxu0 0.0
    %1018 = vmatpush1.msra.mxu0 0.0
    %1019 = vmatprep.subr.mxu0 0.0
    %1020 = vmatpush1.msra.mxu0 0.0
    %1021 = vmatprep.subr.mxu0 0.0
    %1022 = vmatpush1.msra.mxu0 0.0
    %1023 = vmatprep.subr.mxu0 0.0
    %1024 = vmatpush1.msra.mxu0 0.0
    %1025 = vmatprep.subr.mxu0 0.0
    %1026 = vmatpush1.msra.mxu0 0.0
    %1027 = vmatprep.subr.mxu0 0.0
    %1028 = vmatpush1.msra.mxu0 0.0
    %1029 = vmatprep.subr.mxu0 0.0
    %1030 = vmatpush1.msra.mxu0 0.0
    %1031 = vmatprep.subr.mxu0 0.0
    %1032 = vmatpush1.msra.mxu0 0.0
    %1033 = vmatprep.subr.mxu0 0.0
    %1034 = vmatpush1.msra.mxu0 0.0
    %1035 = vmatprep.subr.mxu0 0.0
    %1036 = vmatpush1.msra.mxu0 0.0
    %1037 = vmatprep.subr.mxu0 0.0
    %1038 = vmatpush1.msra.mxu0 0.0
    %1039 = vmatprep.subr.mxu0 0.0
    %1040 = vmatpush1.msra.mxu0 0.0
    %1041 = vmatprep.subr.mxu0 0.0
    %1042 = vmatpush1.msra.mxu0 0.0
    %1043 = vmatprep.subr.mxu0 0.0
    %1044 = vmatpush1.msra.mxu0 0.0
    %1045 = vmatprep.subr.mxu0 0.0
    %1046 = vmatpush1.msra.mxu0 0.0
    %1047 = vmatprep.subr.mxu0 0.0
    %1048 = vmatpush1.msra.mxu0 0.0
    %1049 = vmatprep.subr.mxu0 0.0
    %1050 = vmatpush1.msra.mxu0 0.0
    %1051 = vmatprep.subr.mxu0 0.0
    %1052 = vmatpush1.msra.mxu0 0.0
    %1053 = vmatprep.subr.mxu0 0.0
    %1054 = vmatpush1.msra.mxu0 0.0
    %1055 = vmatprep.subr.mxu0 0.0
    %1056 = vmatpush1.msra.mxu0 0.0
    %1057 = vmatprep.mubr.f32.mxu0 0.0
    %1058 = vmatmul.mubr.f32.gmra.mrb[0].mxu0 %v991
    %v1059 = vpop.f32.mrb[0].mxu0
    %v1060 = vadd.f32 0.0, %v1059
    %v1061 = vpop.f32.mrb[0].mxu0
    %1062 = vdwg.mxu0
    %vm1063 = vcmask 130048
    %v1065 = vsel %vm1063, %v1060, 0
    %1067 = vmatprep.subr.mxu0 0.0
    %1068 = vmatpush1.msra.mxu0 %v48
    %1069 = vmatprep.subr.mxu0 0.0
    %1070 = vmatpush1.msra.mxu0 %v49
    %1071 = vmatprep.subr.mxu0 0.0
    %1072 = vmatpush1.msra.mxu0 0.0
    %1073 = vmatprep.subr.mxu0 0.0
    %1074 = vmatpush1.msra.mxu0 0.0
    %1075 = vmatprep.subr.mxu0 0.0
    %1076 = vmatpush1.msra.mxu0 0.0
    %1077 = vmatprep.subr.mxu0 0.0
    %1078 = vmatpush1.msra.mxu0 0.0
    %1079 = vmatprep.subr.mxu0 0.0
    %1080 = vmatpush1.msra.mxu0 0.0
    %1081 = vmatprep.subr.mxu0 0.0
    %1082 = vmatpush1.msra.mxu0 0.0
    %1083 = vmatprep.subr.mxu0 0.0
    %1084 = vmatpush1.msra.mxu0 0.0
    %1085 = vmatprep.subr.mxu0 0.0
    %1086 = vmatpush1.msra.mxu0 0.0
    %1087 = vmatprep.subr.mxu0 0.0
    %1088 = vmatpush1.msra.mxu0 0.0
    %1089 = vmatprep.subr.mxu0 0.0
    %1090 = vmatpush1.msra.mxu0 0.0
    %1091 = vmatprep.subr.mxu0 0.0
    %1092 = vmatpush1.msra.mxu0 0.0
    %1093 = vmatprep.subr.mxu0 0.0
    %1094 = vmatpush1.msra.mxu0 0.0
    %1095 = vmatprep.subr.mxu0 0.0
    %1096 = vmatpush1.msra.mxu0 0.0
    %1097 = vmatprep.subr.mxu0 0.0
    %1098 = vmatpush1.msra.mxu0 0.0
    %1099 = vmatprep.subr.mxu0 0.0
    %1100 = vmatpush1.msra.mxu0 0.0
    %1101 = vmatprep.subr.mxu0 0.0
    %1102 = vmatpush1.msra.mxu0 0.0
    %1103 = vmatprep.subr.mxu0 0.0
    %1104 = vmatpush1.msra.mxu0 0.0
    %1105 = vmatprep.subr.mxu0 0.0
    %1106 = vmatpush1.msra.mxu0 0.0
    %1107 = vmatprep.subr.mxu0 0.0
    %1108 = vmatpush1.msra.mxu0 0.0
    %1109 = vmatprep.subr.mxu0 0.0
    %1110 = vmatpush1.msra.mxu0 0.0
    %1111 = vmatprep.subr.mxu0 0.0
    %1112 = vmatpush1.msra.mxu0 0.0
    %1113 = vmatprep.subr.mxu0 0.0
    %1114 = vmatpush1.msra.mxu0 0.0
    %1115 = vmatprep.subr.mxu0 0.0
    %1116 = vmatpush1.msra.mxu0 0.0
    %1117 = vmatprep.subr.mxu0 0.0
    %1118 = vmatpush1.msra.mxu0 0.0
    %1119 = vmatprep.subr.mxu0 0.0
    %1120 = vmatpush1.msra.mxu0 0.0
    %1121 = vmatprep.subr.mxu0 0.0
    %1122 = vmatpush1.msra.mxu0 0.0
    %1123 = vmatprep.subr.mxu0 0.0
    %1124 = vmatpush1.msra.mxu0 0.0
    %1125 = vmatprep.subr.mxu0 0.0
    %1126 = vmatpush1.msra.mxu0 0.0
    %1127 = vmatprep.subr.mxu0 0.0
    %1128 = vmatpush1.msra.mxu0 0.0
    %1129 = vmatprep.subr.mxu0 0.0
    %1130 = vmatpush1.msra.mxu0 0.0
    %1131 = vmatprep.mubr.f32.mxu0 0.0
    %1132 = vmatmul.mubr.f32.gmra.mrb[0].mxu0 %v1065
    %v1133 = vpop.f32.mrb[0].mxu0
    %v1134 = vadd.f32 0.0, %v1133
    %v1135 = vpop.f32.mrb[0].mxu0
    %1136 = vdwg.mxu0
    %v1137 = vsel %vm1063, %v978, 0
    %1139 = vmatprep.subr.mxu0 0.0
    %1140 = vmatpush1.msra.mxu0 %v46
    %1141 = vmatprep.subr.mxu0 0.0
    %1142 = vmatpush1.msra.mxu0 %v47
    %1143 = vmatprep.subr.mxu0 0.0
    %1144 = vmatpush1.msra.mxu0 0.0
    %1145 = vmatprep.subr.mxu0 0.0
    %1146 = vmatpush1.msra.mxu0 0.0
    %1147 = vmatprep.subr.mxu0 0.0
    %1148 = vmatpush1.msra.mxu0 0.0
    %1149 = vmatprep.subr.mxu0 0.0
    %1150 = vmatpush1.msra.mxu0 0.0
    %1151 = vmatprep.subr.mxu0 0.0
    %1152 = vmatpush1.msra.mxu0 0.0
    %1153 = vmatprep.subr.mxu0 0.0
    %1154 = vmatpush1.msra.mxu0 0.0
    %1155 = vmatprep.subr.mxu0 0.0
    %1156 = vmatpush1.msra.mxu0 0.0
    %1157 = vmatprep.subr.mxu0 0.0
    %1158 = vmatpush1.msra.mxu0 0.0
    %1159 = vmatprep.subr.mxu0 0.0
    %1160 = vmatpush1.msra.mxu0 0.0
    %1161 = vmatprep.subr.mxu0 0.0
    %1162 = vmatpush1.msra.mxu0 0.0
    %1163 = vmatprep.subr.mxu0 0.0
    %1164 = vmatpush1.msra.mxu0 0.0
    %1165 = vmatprep.subr.mxu0 0.0
    %1166 = vmatpush1.msra.mxu0 0.0
    %1167 = vmatprep.subr.mxu0 0.0
    %1168 = vmatpush1.msra.mxu0 0.0
    %1169 = vmatprep.subr.mxu0 0.0
    %1170 = vmatpush1.msra.mxu0 0.0
    %1171 = vmatprep.subr.mxu0 0.0
    %1172 = vmatpush1.msra.mxu0 0.0
    %1173 = vmatprep.subr.mxu0 0.0
    %1174 = vmatpush1.msra.mxu0 0.0
    %1175 = vmatprep.subr.mxu0 0.0
    %1176 = vmatpush1.msra.mxu0 0.0
    %1177 = vmatprep.subr.mxu0 0.0
    %1178 = vmatpush1.msra.mxu0 0.0
    %1179 = vmatprep.subr.mxu0 0.0
    %1180 = vmatpush1.msra.mxu0 0.0
    %1181 = vmatprep.subr.mxu0 0.0
    %1182 = vmatpush1.msra.mxu0 0.0
    %1183 = vmatprep.subr.mxu0 0.0
    %1184 = vmatpush1.msra.mxu0 0.0
    %1185 = vmatprep.subr.mxu0 0.0
    %1186 = vmatpush1.msra.mxu0 0.0
    %1187 = vmatprep.subr.mxu0 0.0
    %1188 = vmatpush1.msra.mxu0 0.0
    %1189 = vmatprep.subr.mxu0 0.0
    %1190 = vmatpush1.msra.mxu0 0.0
    %1191 = vmatprep.subr.mxu0 0.0
    %1192 = vmatpush1.msra.mxu0 0.0
    %1193 = vmatprep.subr.mxu0 0.0
    %1194 = vmatpush1.msra.mxu0 0.0
    %1195 = vmatprep.subr.mxu0 0.0
    %1196 = vmatpush1.msra.mxu0 0.0
    %1197 = vmatprep.subr.mxu0 0.0
    %1198 = vmatpush1.msra.mxu0 0.0
    %1199 = vmatprep.subr.mxu0 0.0
    %1200 = vmatpush1.msra.mxu0 0.0
    %1201 = vmatprep.subr.mxu0 0.0
    %1202 = vmatpush1.msra.mxu0 0.0
    %1203 = vmatprep.mubr.f32.mxu0 0.0
    %1204 = vmatmul.mubr.f32.gmra.mrb[0].mxu0 %v1137
    %v1205 = vpop.f32.mrb[0].mxu0
    %v1206 = vadd.f32 %v1134, %v1205
    %v1207 = vpop.f32.mrb[0].mxu0
    %1208 = vdwg.mxu0
    %v1209 = vlaneseq
    %v1210 = vshrl.u32 %v1209, 7
    %v1211 = vsub.s32 0, %v1210
    %v1212 = vrot.slane %v45, %v1211
    %v1213 = vadd.f32 %v1206, %v1212
    %vm1214 = vcmask 39936
    %1215 = vst.msk [vmem:[#allocation4] sm:$0xff] %vm1214, %v1213
    %vm1216 = vcmp.eq.s32.totalorder %v53, 3
    %v1217 = vsel %vm1216, 0.0, -10000.0
    %v1218 = vadd.f32 %v1217, %v50
    %vm1219 = vcmask 36864
    %v1220 = vsel %vm1219, %v1218, -inf
    %1221 = vmax.index.xlane.f32.xlu0 %v1220
    %v1222 = vpop.xlane.xlu0 %1221
    %v1223 = vlaneseq
    %v1224 = vshrl.u32 %v1223, 7
    %v1225 = vsub.s32 %v53, %v1224
    %v1226 = vrot.slane %v1222, %v1225
    %vm1227 = vcmask 32768
    %1228 = vst.msk [vmem:[#allocation5] sm:$0x1] %vm1227, %v1226
    %1229 = vmax.xlane.f32.xlu0 %v1220
    %v1230 = vpop.xlane.xlu0 %1229
    %v1231 = vld [vmem:[#allocation4] sm:$0x1]
    %v1233 = vlaneseq
    %v1234 = vshrl.u32 %v1233, 7
    %v1235 = vsub.s32 0, %v1234
    %v1236 = vrot.slane %v1231, %v1235
    %1238 = vbcast.lane.b32.xlu0 %v1236, 256
    %v1239 = vpop.permute.xlu0 %1238
    %v1241 = vadd.f32 %v1230, %v1239
    %v1243 = vlaneseq
    %v1244 = vshrl.u32 %v1243, 7
    %v1245 = vsub.s32 0, %v1244
    %v1246 = vrot.slane %v50, %v1245
    %1248 = vbcast.lane.b32.xlu0 %v1246, 256
    %v1249 = vpop.permute.xlu0 %1248
    %v1250 = vlaneseq
    %v1251 = vshrl.u32 %v1250, 7
    %v1252 = vsub.s32 1, %v1251
    %v1253 = vrot.slane %v50, %v1252
    %1255 = vbcast.lane.b32.xlu0 %v1253, 256
    %v1256 = vpop.permute.xlu0 %1255
    %v1257 = vlaneseq
    %v1258 = vshrl.u32 %v1257, 7
    %v1259 = vsub.s32 2, %v1258
    %v1260 = vrot.slane %v50, %v1259
    %1262 = vbcast.lane.b32.xlu0 %v1260, 256
    %v1263 = vpop.permute.xlu0 %1262
    %v1264 = vlaneseq
    %v1265 = vshrl.u32 %v1264, 7
    %v1266 = vsub.s32 3, %v1265
    %v1267 = vrot.slane %v50, %v1266
    %1269 = vbcast.lane.b32.xlu0 %v1267, 256
    %v1270 = vpop.permute.xlu0 %1269
    %v1271 = vlaneseq
    %v1272 = vshrl.u32 %v1271, 7
    %v1273 = vsub.s32 4, %v1272
    %v1274 = vrot.slane %v50, %v1273
    %1276 = vbcast.lane.b32.xlu0 %v1274, 256
    %v1277 = vpop.permute.xlu0 %1276
    %v1283 = vadd.f32 %v1241, %v1249
    %v1284 = vadd.f32 %v1241, %v1256
    %v1285 = vadd.f32 %v1241, %v1263
    %v1286 = vadd.f32 %v1241, %v1270
    %v1287 = vadd.f32 %v1241, %v1277
    %1293 = vset.pattern.permute.xlu0 0
    %1294 = vperm.xlu0 %1293, %v1283
    %v1295 = vpop.permute.xlu0 %1294
    %1296 = vset.pattern.permute.xlu0 0
    %1297 = vperm.xlu0 %1296, %v1284
    %v1298 = vpop.permute.xlu0 %1297
    %1299 = vset.pattern.permute.xlu0 0
    %1300 = vperm.xlu0 %1299, %v1285
    %v1301 = vpop.permute.xlu0 %1300
    %1302 = vset.pattern.permute.xlu0 0
    %1303 = vperm.xlu0 %1302, %v1286
    %v1304 = vpop.permute.xlu0 %1303
    %1305 = vset.pattern.permute.xlu0 0
    %1306 = vperm.xlu0 %1305, %v1287
    %v1307 = vpop.permute.xlu0 %1306
    %v1308 = vlaneseq
    %v1309 = vshrl.u32 %v1308, 7
    %v1310 = vsub.s32 %v53, %v1309
    %v1311 = vrot.slane %v1295, %v1310
    %v1312 = vlaneseq
    %v1313 = vshrl.u32 %v1312, 7
    %v1314 = vsub.s32 %v53, %v1313
    %v1315 = vrot.slane %v1298, %v1314
    %v1316 = vlaneseq
    %v1317 = vshrl.u32 %v1316, 7
    %v1318 = vsub.s32 %v53, %v1317
    %v1319 = vrot.slane %v1301, %v1318
    %v1320 = vlaneseq
    %v1321 = vshrl.u32 %v1320, 7
    %v1322 = vsub.s32 %v53, %v1321
    %v1323 = vrot.slane %v1304, %v1322
    %v1324 = vlaneseq
    %v1325 = vshrl.u32 %v1324, 7
    %v1326 = vsub.s32 %v53, %v1325
    %v1327 = vrot.slane %v1307, %v1326
    %vm1328 = vcmask 1041409
    %v1329 = vsel %vm1328, %v1315, %v1311
    %vm1330 = vcmask 1042434
    %v1331 = vsel %vm1330, %v1319, %v1329
    %vm1332 = vcmask 1043459
    %v1333 = vsel %vm1332, %v1323, %v1331
    %vm1334 = vcmask 1044484
    %v1335 = vsel %vm1334, %v1327, %v1333
    %v1337 = vsel %vm1219, %v1335, -inf
    %1338 = vmax.index.xlane.f32.xlu0 %v1337
    %v1339 = vpop.xlane.xlu0 %1338
    %v1340 = vlaneseq
    %v1341 = vshrl.u32 %v1340, 7
    %v1342 = vsub.s32 %v53, %v1341
    %v1343 = vrot.slane %v1339, %v1342
    %1344 = vst.msk [vmem:[#allocation5 + $0x1] sm:$0x1] %vm1227, %v1343
    %1345 = vmax.xlane.f32.xlu0 %v1337
    %v1346 = vpop.xlane.xlu0 %1345
    %v1347 = vld [vmem:[#allocation4 + $0x1] sm:$0x1]
    %v1349 = vlaneseq
    %v1350 = vshrl.u32 %v1349, 7
    %v1351 = vsub.s32 0, %v1350
    %v1352 = vrot.slane %v1347, %v1351
    %1354 = vbcast.lane.b32.xlu0 %v1352, 256
    %v1355 = vpop.permute.xlu0 %1354
    %v1357 = vadd.f32 %v1346, %v1355
    %v1358 = vadd.f32 %v1357, %v1249
    %v1359 = vadd.f32 %v1357, %v1256
    %v1360 = vadd.f32 %v1357, %v1263
    %v1361 = vadd.f32 %v1357, %v1270
    %v1362 = vadd.f32 %v1357, %v1277
    %1368 = vset.pattern.permute.xlu0 0
    %1369 = vperm.xlu0 %1368, %v1358
    %v1370 = vpop.permute.xlu0 %1369
    %1371 = vset.pattern.permute.xlu0 0
    %1372 = vperm.xlu0 %1371, %v1359
    %v1373 = vpop.permute.xlu0 %1372
    %1374 = vset.pattern.permute.xlu0 0
    %1375 = vperm.xlu0 %1374, %v1360
    %v1376 = vpop.permute.xlu0 %1375
    %1377 = vset.pattern.permute.xlu0 0
    %1378 = vperm.xlu0 %1377, %v1361
    %v1379 = vpop.permute.xlu0 %1378
    %1380 = vset.pattern.permute.xlu0 0
    %1381 = vperm.xlu0 %1380, %v1362
    %v1382 = vpop.permute.xlu0 %1381
    %v1383 = vlaneseq
    %v1384 = vshrl.u32 %v1383, 7
    %v1385 = vsub.s32 %v53, %v1384
    %v1386 = vrot.slane %v1370, %v1385
    %v1387 = vlaneseq
    %v1388 = vshrl.u32 %v1387, 7
    %v1389 = vsub.s32 %v53, %v1388
    %v1390 = vrot.slane %v1373, %v1389
    %v1391 = vlaneseq
    %v1392 = vshrl.u32 %v1391, 7
    %v1393 = vsub.s32 %v53, %v1392
    %v1394 = vrot.slane %v1376, %v1393
    %v1395 = vlaneseq
    %v1396 = vshrl.u32 %v1395, 7
    %v1397 = vsub.s32 %v53, %v1396
    %v1398 = vrot.slane %v1379, %v1397
    %v1399 = vlaneseq
    %v1400 = vshrl.u32 %v1399, 7
    %v1401 = vsub.s32 %v53, %v1400
    %v1402 = vrot.slane %v1382, %v1401
    %v1403 = vsel %vm1328, %v1390, %v1386
    %v1404 = vsel %vm1330, %v1394, %v1403
    %v1405 = vsel %vm1332, %v1398, %v1404
    %v1406 = vsel %vm1334, %v1402, %v1405
    %v1408 = vsel %vm1219, %v1406, -inf
    %1409 = vmax.index.xlane.f32.xlu0 %v1408
    %v1410 = vpop.xlane.xlu0 %1409
    %v1411 = vlaneseq
    %v1412 = vshrl.u32 %v1411, 7
    %v1413 = vsub.s32 %v53, %v1412
    %v1414 = vrot.slane %v1410, %v1413
    %1415 = vst.msk [vmem:[#allocation5 + $0x2] sm:$0x1] %vm1227, %v1414
    %1416 = vmax.xlane.f32.xlu0 %v1408
    %v1417 = vpop.xlane.xlu0 %1416
    %v1418 = vld [vmem:[#allocation4 + $0x2] sm:$0x1]
    %v1420 = vlaneseq
    %v1421 = vshrl.u32 %v1420, 7
    %v1422 = vsub.s32 0, %v1421
    %v1423 = vrot.slane %v1418, %v1422
    %1425 = vbcast.lane.b32.xlu0 %v1423, 256
    %v1426 = vpop.permute.xlu0 %1425
    %v1428 = vadd.f32 %v1417, %v1426
    %v1429 = vadd.f32 %v1428, %v1249
    %v1430 = vadd.f32 %v1428, %v1256
    %v1431 = vadd.f32 %v1428, %v1263
    %v1432 = vadd.f32 %v1428, %v1270
    %v1433 = vadd.f32 %v1428, %v1277
    %1439 = vset.pattern.permute.xlu0 0
    %1440 = vperm.xlu0 %1439, %v1429
    %v1441 = vpop.permute.xlu0 %1440
    %1442 = vset.pattern.permute.xlu0 0
    %1443 = vperm.xlu0 %1442, %v1430
    %v1444 = vpop.permute.xlu0 %1443
    %1445 = vset.pattern.permute.xlu0 0
    %1446 = vperm.xlu0 %1445, %v1431
    %v1447 = vpop.permute.xlu0 %1446
    %1448 = vset.pattern.permute.xlu0 0
    %1449 = vperm.xlu0 %1448, %v1432
    %v1450 = vpop.permute.xlu0 %1449
    %1451 = vset.pattern.permute.xlu0 0
    %1452 = vperm.xlu0 %1451, %v1433
    %v1453 = vpop.permute.xlu0 %1452
    %v1454 = vlaneseq
    %v1455 = vshrl.u32 %v1454, 7
    %v1456 = vsub.s32 %v53, %v1455
    %v1457 = vrot.slane %v1441, %v1456
    %v1458 = vlaneseq
    %v1459 = vshrl.u32 %v1458, 7
    %v1460 = vsub.s32 %v53, %v1459
    %v1461 = vrot.slane %v1444, %v1460
    %v1462 = vlaneseq
    %v1463 = vshrl.u32 %v1462, 7
    %v1464 = vsub.s32 %v53, %v1463
    %v1465 = vrot.slane %v1447, %v1464
    %v1466 = vlaneseq
    %v1467 = vshrl.u32 %v1466, 7
    %v1468 = vsub.s32 %v53, %v1467
    %v1469 = vrot.slane %v1450, %v1468
    %v1470 = vlaneseq
    %v1471 = vshrl.u32 %v1470, 7
    %v1472 = vsub.s32 %v53, %v1471
    %v1473 = vrot.slane %v1453, %v1472
    %v1474 = vsel %vm1328, %v1461, %v1457
    %v1475 = vsel %vm1330, %v1465, %v1474
    %v1476 = vsel %vm1332, %v1469, %v1475
    %v1477 = vsel %vm1334, %v1473, %v1476
    %v1479 = vsel %vm1219, %v1477, -inf
    %1480 = vmax.index.xlane.f32.xlu0 %v1479
    %v1481 = vpop.xlane.xlu0 %1480
    %v1482 = vlaneseq
    %v1483 = vshrl.u32 %v1482, 7
    %v1484 = vsub.s32 %v53, %v1483
    %v1485 = vrot.slane %v1481, %v1484
    %1486 = vst.msk [vmem:[#allocation5 + $0x3] sm:$0x1] %vm1227, %v1485
    %1487 = vmax.xlane.f32.xlu0 %v1479
    %v1488 = vpop.xlane.xlu0 %1487
    %v1489 = vld [vmem:[#allocation4 + $0x3] sm:$0x1]
    %v1491 = vlaneseq
    %v1492 = vshrl.u32 %v1491, 7
    %v1493 = vsub.s32 0, %v1492
    %v1494 = vrot.slane %v1489, %v1493
    %1496 = vbcast.lane.b32.xlu0 %v1494, 256
    %v1497 = vpop.permute.xlu0 %1496
    %v1499 = vadd.f32 %v1488, %v1497
    %v1500 = vadd.f32 %v1499, %v1249
    %v1501 = vadd.f32 %v1499, %v1256
    %v1502 = vadd.f32 %v1499, %v1263
    %v1503 = vadd.f32 %v1499, %v1270
    %v1504 = vadd.f32 %v1499, %v1277
    %1510 = vset.pattern.permute.xlu0 0
    %1511 = vperm.xlu0 %1510, %v1500
    %v1512 = vpop.permute.xlu0 %1511
    %1513 = vset.pattern.permute.xlu0 0
    %1514 = vperm.xlu0 %1513, %v1501
    %v1515 = vpop.permute.xlu0 %1514
    %1516 = vset.pattern.permute.xlu0 0
    %1517 = vperm.xlu0 %1516, %v1502
    %v1518 = vpop.permute.xlu0 %1517
    %1519 = vset.pattern.permute.xlu0 0
    %1520 = vperm.xlu0 %1519, %v1503
    %v1521 = vpop.permute.xlu0 %1520
    %1522 = vset.pattern.permute.xlu0 0
    %1523 = vperm.xlu0 %1522, %v1504
    %v1524 = vpop.permute.xlu0 %1523
    %v1525 = vlaneseq
    %v1526 = vshrl.u32 %v1525, 7
    %v1527 = vsub.s32 %v53, %v1526
    %v1528 = vrot.slane %v1512, %v1527
    %v1529 = vlaneseq
    %v1530 = vshrl.u32 %v1529, 7
    %v1531 = vsub.s32 %v53, %v1530
    %v1532 = vrot.slane %v1515, %v1531
    %v1533 = vlaneseq
    %v1534 = vshrl.u32 %v1533, 7
    %v1535 = vsub.s32 %v53, %v1534
    %v1536 = vrot.slane %v1518, %v1535
    %v1537 = vlaneseq
    %v1538 = vshrl.u32 %v1537, 7
    %v1539 = vsub.s32 %v53, %v1538
    %v1540 = vrot.slane %v1521, %v1539
    %v1541 = vlaneseq
    %v1542 = vshrl.u32 %v1541, 7
    %v1543 = vsub.s32 %v53, %v1542
    %v1544 = vrot.slane %v1524, %v1543
    %v1545 = vsel %vm1328, %v1532, %v1528
    %v1546 = vsel %vm1330, %v1536, %v1545
    %v1547 = vsel %vm1332, %v1540, %v1546
    %v1548 = vsel %vm1334, %v1544, %v1547
    %v1550 = vsel %vm1219, %v1548, -inf
    %1551 = vmax.index.xlane.f32.xlu0 %v1550
    %v1552 = vpop.xlane.xlu0 %1551
    %v1553 = vlaneseq
    %v1554 = vshrl.u32 %v1553, 7
    %v1555 = vsub.s32 %v53, %v1554
    %v1556 = vrot.slane %v1552, %v1555
    %1557 = vst.msk [vmem:[#allocation5 + $0x4] sm:$0x1] %vm1227, %v1556
    %1558 = vmax.xlane.f32.xlu0 %v1550
    %v1559 = vpop.xlane.xlu0 %1558
    %v1560 = vld [vmem:[#allocation4 + $0x4] sm:$0x1]
    %v1562 = vlaneseq
    %v1563 = vshrl.u32 %v1562, 7
    %v1564 = vsub.s32 0, %v1563
    %v1565 = vrot.slane %v1560, %v1564
    %1567 = vbcast.lane.b32.xlu0 %v1565, 256
    %v1568 = vpop.permute.xlu0 %1567
    %v1570 = vadd.f32 %v1559, %v1568
    %v1571 = vadd.f32 %v1570, %v1249
    %v1572 = vadd.f32 %v1570, %v1256
    %v1573 = vadd.f32 %v1570, %v1263
    %v1574 = vadd.f32 %v1570, %v1270
    %v1575 = vadd.f32 %v1570, %v1277
    %1581 = vset.pattern.permute.xlu0 0
    %1582 = vperm.xlu0 %1581, %v1571
    %v1583 = vpop.permute.xlu0 %1582
    %1584 = vset.pattern.permute.xlu0 0
    %1585 = vperm.xlu0 %1584, %v1572
    %v1586 = vpop.permute.xlu0 %1585
    %1587 = vset.pattern.permute.xlu0 0
    %1588 = vperm.xlu0 %1587, %v1573
    %v1589 = vpop.permute.xlu0 %1588
    %1590 = vset.pattern.permute.xlu0 0
    %1591 = vperm.xlu0 %1590, %v1574
    %v1592 = vpop.permute.xlu0 %1591
    %1593 = vset.pattern.permute.xlu0 0
    %1594 = vperm.xlu0 %1593, %v1575
    %v1595 = vpop.permute.xlu0 %1594
    %v1596 = vlaneseq
    %v1597 = vshrl.u32 %v1596, 7
    %v1598 = vsub.s32 %v53, %v1597
    %v1599 = vrot.slane %v1583, %v1598
    %v1600 = vlaneseq
    %v1601 = vshrl.u32 %v1600, 7
    %v1602 = vsub.s32 %v53, %v1601
    %v1603 = vrot.slane %v1586, %v1602
    %v1604 = vlaneseq
    %v1605 = vshrl.u32 %v1604, 7
    %v1606 = vsub.s32 %v53, %v1605
    %v1607 = vrot.slane %v1589, %v1606
    %v1608 = vlaneseq
    %v1609 = vshrl.u32 %v1608, 7
    %v1610 = vsub.s32 %v53, %v1609
    %v1611 = vrot.slane %v1592, %v1610
    %v1612 = vlaneseq
    %v1613 = vshrl.u32 %v1612, 7
    %v1614 = vsub.s32 %v53, %v1613
    %v1615 = vrot.slane %v1595, %v1614
    %v1616 = vsel %vm1328, %v1603, %v1599
    %v1617 = vsel %vm1330, %v1607, %v1616
    %v1618 = vsel %vm1332, %v1611, %v1617
    %v1619 = vsel %vm1334, %v1615, %v1618
    %v1621 = vsel %vm1219, %v1619, -inf
    %1622 = vmax.index.xlane.f32.xlu0 %v1621
    %v1623 = vpop.xlane.xlu0 %1622
    %v1624 = vlaneseq
    %v1625 = vshrl.u32 %v1624, 7
    %v1626 = vsub.s32 %v53, %v1625
    %v1627 = vrot.slane %v1623, %v1626
    %1628 = vst.msk [vmem:[#allocation5 + $0x5] sm:$0x1] %vm1227, %v1627
    %1629 = vmax.xlane.f32.xlu0 %v1621
    %v1630 = vpop.xlane.xlu0 %1629
    %v1631 = vld [vmem:[#allocation4 + $0x5] sm:$0x1]
    %v1633 = vlaneseq
    %v1634 = vshrl.u32 %v1633, 7
    %v1635 = vsub.s32 0, %v1634
    %v1636 = vrot.slane %v1631, %v1635
    %1638 = vbcast.lane.b32.xlu0 %v1636, 256
    %v1639 = vpop.permute.xlu0 %1638
    %v1641 = vadd.f32 %v1630, %v1639
    %v1642 = vadd.f32 %v1641, %v1249
    %v1643 = vadd.f32 %v1641, %v1256
    %v1644 = vadd.f32 %v1641, %v1263
    %v1645 = vadd.f32 %v1641, %v1270
    %v1646 = vadd.f32 %v1641, %v1277
    %1652 = vset.pattern.permute.xlu0 0
    %1653 = vperm.xlu0 %1652, %v1642
    %v1654 = vpop.permute.xlu0 %1653
    %1655 = vset.pattern.permute.xlu0 0
    %1656 = vperm.xlu0 %1655, %v1643
    %v1657 = vpop.permute.xlu0 %1656
    %1658 = vset.pattern.permute.xlu0 0
    %1659 = vperm.xlu0 %1658, %v1644
    %v1660 = vpop.permute.xlu0 %1659
    %1661 = vset.pattern.permute.xlu0 0
    %1662 = vperm.xlu0 %1661, %v1645
    %v1663 = vpop.permute.xlu0 %1662
    %1664 = vset.pattern.permute.xlu0 0
    %1665 = vperm.xlu0 %1664, %v1646
    %v1666 = vpop.permute.xlu0 %1665
    %v1667 = vlaneseq
    %v1668 = vshrl.u32 %v1667, 7
    %v1669 = vsub.s32 %v53, %v1668
    %v1670 = vrot.slane %v1654, %v1669
    %v1671 = vlaneseq
    %v1672 = vshrl.u32 %v1671, 7
    %v1673 = vsub.s32 %v53, %v1672
    %v1674 = vrot.slane %v1657, %v1673
    %v1675 = vlaneseq
    %v1676 = vshrl.u32 %v1675, 7
    %v1677 = vsub.s32 %v53, %v1676
    %v1678 = vrot.slane %v1660, %v1677
    %v1679 = vlaneseq
    %v1680 = vshrl.u32 %v1679, 7
    %v1681 = vsub.s32 %v53, %v1680
    %v1682 = vrot.slane %v1663, %v1681
    %v1683 = vlaneseq
    %v1684 = vshrl.u32 %v1683, 7
    %v1685 = vsub.s32 %v53, %v1684
    %v1686 = vrot.slane %v1666, %v1685
    %v1687 = vsel %vm1328, %v1674, %v1670
    %v1688 = vsel %vm1330, %v1678, %v1687
    %v1689 = vsel %vm1332, %v1682, %v1688
    %v1690 = vsel %vm1334, %v1686, %v1689
    %v1692 = vsel %vm1219, %v1690, -inf
    %1693 = vmax.index.xlane.f32.xlu0 %v1692
    %v1694 = vpop.xlane.xlu0 %1693
    %v1695 = vlaneseq
    %v1696 = vshrl.u32 %v1695, 7
    %v1697 = vsub.s32 %v53, %v1696
    %v1698 = vrot.slane %v1694, %v1697
    %1699 = vst.msk [vmem:[#allocation5 + $0x6] sm:$0x1] %vm1227, %v1698
    %1700 = vmax.xlane.f32.xlu0 %v1692
    %v1701 = vpop.xlane.xlu0 %1700
    %v1702 = vld [vmem:[#allocation4 + $0x6] sm:$0x1]
    %v1704 = vlaneseq
    %v1705 = vshrl.u32 %v1704, 7
    %v1706 = vsub.s32 0, %v1705
    %v1707 = vrot.slane %v1702, %v1706
    %1709 = vbcast.lane.b32.xlu0 %v1707, 256
    %v1710 = vpop.permute.xlu0 %1709
    %v1712 = vadd.f32 %v1701, %v1710
    %v1713 = vadd.f32 %v1712, %v1249
    %v1714 = vadd.f32 %v1712, %v1256
    %v1715 = vadd.f32 %v1712, %v1263
    %v1716 = vadd.f32 %v1712, %v1270
    %v1717 = vadd.f32 %v1712, %v1277
    %1723 = vset.pattern.permute.xlu0 0
    %1724 = vperm.xlu0 %1723, %v1713
    %v1725 = vpop.permute.xlu0 %1724
    %1726 = vset.pattern.permute.xlu0 0
    %1727 = vperm.xlu0 %1726, %v1714
    %v1728 = vpop.permute.xlu0 %1727
    %1729 = vset.pattern.permute.xlu0 0
    %1730 = vperm.xlu0 %1729, %v1715
    %v1731 = vpop.permute.xlu0 %1730
    %1732 = vset.pattern.permute.xlu0 0
    %1733 = vperm.xlu0 %1732, %v1716
    %v1734 = vpop.permute.xlu0 %1733
    %1735 = vset.pattern.permute.xlu0 0
    %1736 = vperm.xlu0 %1735, %v1717
    %v1737 = vpop.permute.xlu0 %1736
    %v1738 = vlaneseq
    %v1739 = vshrl.u32 %v1738, 7
    %v1740 = vsub.s32 %v53, %v1739
    %v1741 = vrot.slane %v1725, %v1740
    %v1742 = vlaneseq
    %v1743 = vshrl.u32 %v1742, 7
    %v1744 = vsub.s32 %v53, %v1743
    %v1745 = vrot.slane %v1728, %v1744
    %v1746 = vlaneseq
    %v1747 = vshrl.u32 %v1746, 7
    %v1748 = vsub.s32 %v53, %v1747
    %v1749 = vrot.slane %v1731, %v1748
    %v1750 = vlaneseq
    %v1751 = vshrl.u32 %v1750, 7
    %v1752 = vsub.s32 %v53, %v1751
    %v1753 = vrot.slane %v1734, %v1752
    %v1754 = vlaneseq
    %v1755 = vshrl.u32 %v1754, 7
    %v1756 = vsub.s32 %v53, %v1755
    %v1757 = vrot.slane %v1737, %v1756
    %v1758 = vsel %vm1328, %v1745, %v1741
    %v1759 = vsel %vm1330, %v1749, %v1758
    %v1760 = vsel %vm1332, %v1753, %v1759
    %v1761 = vsel %vm1334, %v1757, %v1760
    %v1763 = vsel %vm1219, %v1761, -inf
    %1764 = vmax.index.xlane.f32.xlu0 %v1763
    %v1765 = vpop.xlane.xlu0 %1764
    %v1766 = vlaneseq
    %v1767 = vshrl.u32 %v1766, 7
    %v1768 = vsub.s32 %v53, %v1767
    %v1769 = vrot.slane %v1765, %v1768
    %1770 = vst.msk [vmem:[#allocation5 + $0x7] sm:$0x1] %vm1227, %v1769
    %1771 = vmax.xlane.f32.xlu0 %v1763
    %v1772 = vpop.xlane.xlu0 %1771
    %v1773 = vld [vmem:[#allocation4 + $0x7] sm:$0x1]
    %v1775 = vlaneseq
    %v1776 = vshrl.u32 %v1775, 7
    %v1777 = vsub.s32 0, %v1776
    %v1778 = vrot.slane %v1773, %v1777
    %1780 = vbcast.lane.b32.xlu0 %v1778, 256
    %v1781 = vpop.permute.xlu0 %1780
    %v1783 = vadd.f32 %v1772, %v1781
    %v1784 = vadd.f32 %v1783, %v1277
    %vm1785 = vcmask 4096
    %v1786 = vsel %vm1785, %v1784, -inf
    %v1787 = vrot.slane %v1786, 4
    %v1788 = vmax.f32 %v1786, %v1787
    %v1789 = vrot.slane %v1788, 2
    %v1790 = vmax.f32 %v1788, %v1789
    %v1791 = vrot.slane %v1790, 1
    %v1792 = vmax.f32 %v1790, %v1791
    %s1793 = vtos %v1792
    %v1794 = vstv %s1793
    %vm1795 = vcmp.eq.f32.partialorder %v1784, %v1794
    %1797 = vbcast.lane.b32.xlu0 %v53, 256
    %v1798 = vpop.permute.xlu0 %1797
    %v1799 = vsel %vm1795, %v1798, 5
    %v1800 = vsel %vm1785, %v1799, 2147483647
    %v1801 = vrot.slane %v1800, 4
    %vm1802 = vcmp.lt.s32.totalorder %v1800, %v1801
    %v1803 = vsel %vm1802, %v1800, %v1801
    %v1804 = vrot.slane %v1803, 2
    %vm1805 = vcmp.lt.s32.totalorder %v1803, %v1804
    %v1806 = vsel %vm1805, %v1803, %v1804
    %v1807 = vrot.slane %v1806, 1
    %vm1808 = vcmp.lt.s32.totalorder %v1806, %v1807
    %v1809 = vsel %vm1808, %v1806, %v1807
    %s1810 = vtos %v1809
    %vm1811 = vcmp.eq.s32.totalorder %v53, 7
    %v1812 = vstv %s1810
    %v1813 = vsel %vm1811, %v1812, 0
    %v1814 = vld [vmem:[#allocation5 + $0x7] sm:$0x1]
    %vm1815 = vcmp.eq.s32.totalorder %v53, %v1812
    %v1816 = vsel %vm1815, %v1814, 0
    %v1817 = vsel %vm1227, %v1816, 0
    %v1818 = vand.u32 %v1817, 65535
    %v1819 = vshrl.u32 %v1817, 16
    %v1820 = vcvt.s32.f32 %v1818
    %v1821 = vcvt.s32.f32 %v1819
    %1822 = vadd.xlane.f32.xlu0 %v1820
    %v1823 = vpop.xlane.xlu0 %1822
    %1824 = vadd.xlane.f32.xlu0 %v1821
    %v1825 = vpop.xlane.xlu0 %1824
    %v1826 = vcvt.f32.s32 %v1823
    %v1827 = vcvt.f32.s32 %v1825
    %v1828 = vshll.u32 %v1827, 16
    %v1829 = vadd.s32 %v1828, %v1826
    %v1830 = vrot.slane %v1829, 4
    %v1831 = vadd.s32 %v1829, %v1830
    %v1832 = vrot.slane %v1831, 2
    %v1833 = vadd.s32 %v1831, %v1832
    %v1834 = vrot.slane %v1833, 1
    %v1835 = vadd.s32 %v1833, %v1834
    %s1836 = vtos %v1835
    %vm1837 = vcmp.eq.s32.totalorder %v53, 6
    %v1838 = vstv %s1836
    %v1839 = vsel %vm1837, %v1838, %v1813
    %v1840 = vld [vmem:[#allocation5 + $0x6] sm:$0x1]
    %vm1841 = vcmp.eq.s32.totalorder %v53, %v1838
    %v1842 = vsel %vm1841, %v1840, 0
    %v1843 = vsel %vm1227, %v1842, 0
    %v1844 = vand.u32 %v1843, 65535
    %v1845 = vshrl.u32 %v1843, 16
    %v1846 = vcvt.s32.f32 %v1844
    %v1847 = vcvt.s32.f32 %v1845
    %1848 = vadd.xlane.f32.xlu0 %v1846
    %v1849 = vpop.xlane.xlu0 %1848
    %1850 = vadd.xlane.f32.xlu0 %v1847
    %v1851 = vpop.xlane.xlu0 %1850
    %v1852 = vcvt.f32.s32 %v1849
    %v1853 = vcvt.f32.s32 %v1851
    %v1854 = vshll.u32 %v1853, 16
    %v1855 = vadd.s32 %v1854, %v1852
    %v1856 = vrot.slane %v1855, 4
    %v1857 = vadd.s32 %v1855, %v1856
    %v1858 = vrot.slane %v1857, 2
    %v1859 = vadd.s32 %v1857, %v1858
    %v1860 = vrot.slane %v1859, 1
    %v1861 = vadd.s32 %v1859, %v1860
    %s1862 = vtos %v1861
    %vm1863 = vcmp.eq.s32.totalorder %v53, 5
    %v1864 = vstv %s1862
    %v1865 = vsel %vm1863, %v1864, %v1839
    %v1866 = vld [vmem:[#allocation5 + $0x5] sm:$0x1]
    %vm1867 = vcmp.eq.s32.totalorder %v53, %v1864
    %v1868 = vsel %vm1867, %v1866, 0
    %v1869 = vsel %vm1227, %v1868, 0
    %v1870 = vand.u32 %v1869, 65535
    %v1871 = vshrl.u32 %v1869, 16
    %v1872 = vcvt.s32.f32 %v1870
    %v1873 = vcvt.s32.f32 %v1871
    %1874 = vadd.xlane.f32.xlu0 %v1872
    %v1875 = vpop.xlane.xlu0 %1874
    %1876 = vadd.xlane.f32.xlu0 %v1873
    %v1877 = vpop.xlane.xlu0 %1876
    %v1878 = vcvt.f32.s32 %v1875
    %v1879 = vcvt.f32.s32 %v1877
    %v1880 = vshll.u32 %v1879, 16
    %v1881 = vadd.s32 %v1880, %v1878
    %v1882 = vrot.slane %v1881, 4
    %v1883 = vadd.s32 %v1881, %v1882
    %v1884 = vrot.slane %v1883, 2
    %v1885 = vadd.s32 %v1883, %v1884
    %v1886 = vrot.slane %v1885, 1
    %v1887 = vadd.s32 %v1885, %v1886
    %s1888 = vtos %v1887
    %vm1889 = vcmp.eq.s32.totalorder %v53, 4
    %v1890 = vstv %s1888
    %v1891 = vsel %vm1889, %v1890, %v1865
    %v1892 = vld [vmem:[#allocation5 + $0x4] sm:$0x1]
    %vm1893 = vcmp.eq.s32.totalorder %v53, %v1890
    %v1894 = vsel %vm1893, %v1892, 0
    %v1895 = vsel %vm1227, %v1894, 0
    %v1896 = vand.u32 %v1895, 65535
    %v1897 = vshrl.u32 %v1895, 16
    %v1898 = vcvt.s32.f32 %v1896
    %v1899 = vcvt.s32.f32 %v1897
    %1900 = vadd.xlane.f32.xlu0 %v1898
    %v1901 = vpop.xlane.xlu0 %1900
    %1902 = vadd.xlane.f32.xlu0 %v1899
    %v1903 = vpop.xlane.xlu0 %1902
    %v1904 = vcvt.f32.s32 %v1901
    %v1905 = vcvt.f32.s32 %v1903
    %v1906 = vshll.u32 %v1905, 16
    %v1907 = vadd.s32 %v1906, %v1904
    %v1908 = vrot.slane %v1907, 4
    %v1909 = vadd.s32 %v1907, %v1908
    %v1910 = vrot.slane %v1909, 2
    %v1911 = vadd.s32 %v1909, %v1910
    %v1912 = vrot.slane %v1911, 1
    %v1913 = vadd.s32 %v1911, %v1912
    %s1914 = vtos %v1913
    %v1915 = vstv %s1914
    %v1916 = vsel %vm1216, %v1915, %v1891
    %v1917 = vld [vmem:[#allocation5 + $0x3] sm:$0x1]
    %vm1918 = vcmp.eq.s32.totalorder %v53, %v1915
    %v1919 = vsel %vm1918, %v1917, 0
    %v1920 = vsel %vm1227, %v1919, 0
    %v1921 = vand.u32 %v1920, 65535
    %v1922 = vshrl.u32 %v1920, 16
    %v1923 = vcvt.s32.f32 %v1921
    %v1924 = vcvt.s32.f32 %v1922
    %1925 = vadd.xlane.f32.xlu0 %v1923
    %v1926 = vpop.xlane.xlu0 %1925
    %1927 = vadd.xlane.f32.xlu0 %v1924
    %v1928 = vpop.xlane.xlu0 %1927
    %v1929 = vcvt.f32.s32 %v1926
    %v1930 = vcvt.f32.s32 %v1928
    %v1931 = vshll.u32 %v1930, 16
    %v1932 = vadd.s32 %v1931, %v1929
    %v1933 = vrot.slane %v1932, 4
    %v1934 = vadd.s32 %v1932, %v1933
    %v1935 = vrot.slane %v1934, 2
    %v1936 = vadd.s32 %v1934, %v1935
    %v1937 = vrot.slane %v1936, 1
    %v1938 = vadd.s32 %v1936, %v1937
    %s1939 = vtos %v1938
    %vm1940 = vcmp.eq.s32.totalorder %v53, 2
    %v1941 = vstv %s1939
    %v1942 = vsel %vm1940, %v1941, %v1916
    %v1943 = vld [vmem:[#allocation5 + $0x2] sm:$0x1]
    %vm1944 = vcmp.eq.s32.totalorder %v53, %v1941
    %v1945 = vsel %vm1944, %v1943, 0
    %v1946 = vsel %vm1227, %v1945, 0
    %v1947 = vand.u32 %v1946, 65535
    %v1948 = vshrl.u32 %v1946, 16
    %v1949 = vcvt.s32.f32 %v1947
    %v1950 = vcvt.s32.f32 %v1948
    %1951 = vadd.xlane.f32.xlu0 %v1949
    %v1952 = vpop.xlane.xlu0 %1951
    %1953 = vadd.xlane.f32.xlu0 %v1950
    %v1954 = vpop.xlane.xlu0 %1953
    %v1955 = vcvt.f32.s32 %v1952
    %v1956 = vcvt.f32.s32 %v1954
    %v1957 = vshll.u32 %v1956, 16
    %v1958 = vadd.s32 %v1957, %v1955
    %v1959 = vrot.slane %v1958, 4
    %v1960 = vadd.s32 %v1958, %v1959
    %v1961 = vrot.slane %v1960, 2
    %v1962 = vadd.s32 %v1960, %v1961
    %v1963 = vrot.slane %v1962, 1
    %v1964 = vadd.s32 %v1962, %v1963
    %s1965 = vtos %v1964
    %vm1966 = vcmp.eq.s32.totalorder %v53, 1
    %v1967 = vstv %s1965
    %v1968 = vsel %vm1966, %v1967, %v1942
    %v1969 = vld [vmem:[#allocation5 + $0x1] sm:$0x1]
    %vm1970 = vcmp.eq.s32.totalorder %v53, %v1967
    %v1971 = vsel %vm1970, %v1969, 0
    %v1972 = vsel %vm1227, %v1971, 0
    %v1973 = vand.u32 %v1972, 65535
    %v1974 = vshrl.u32 %v1972, 16
    %v1975 = vcvt.s32.f32 %v1973
    %v1976 = vcvt.s32.f32 %v1974
    %1977 = vadd.xlane.f32.xlu0 %v1975
    %v1978 = vpop.xlane.xlu0 %1977
    %1979 = vadd.xlane.f32.xlu0 %v1976
    %v1980 = vpop.xlane.xlu0 %1979
    %v1981 = vcvt.f32.s32 %v1978
    %v1982 = vcvt.f32.s32 %v1980
    %v1983 = vshll.u32 %v1982, 16
    %v1984 = vadd.s32 %v1983, %v1981
    %v1985 = vrot.slane %v1984, 4
    %v1986 = vadd.s32 %v1984, %v1985
    %v1987 = vrot.slane %v1986, 2
    %v1988 = vadd.s32 %v1986, %v1987
    %v1989 = vrot.slane %v1988, 1
    %v1990 = vadd.s32 %v1988, %v1989
    %s1991 = vtos %v1990
    %vm1992 = vcmp.eq.s32.totalorder %v53, 0
    %v1993 = vstv %s1991
    %v1994 = vsel %vm1992, %v1993, %v1968
    %v1995 = vld [vmem:[#allocation5] sm:$0x1]
    %vm1996 = vcmp.eq.s32.totalorder %v53, %v1993
    %v1997 = vsel %vm1996, %v1995, 0
    %v1998 = vsel %vm1227, %v1997, 0
    %v1999 = vand.u32 %v1998, 65535
    %v2000 = vshrl.u32 %v1998, 16
    %v2001 = vcvt.s32.f32 %v1999
    %v2002 = vcvt.s32.f32 %v2000
    %2003 = vadd.xlane.f32.xlu0 %v2001
    %v2004 = vpop.xlane.xlu0 %2003
    %2005 = vadd.xlane.f32.xlu0 %v2002
    %v2006 = vpop.xlane.xlu0 %2005
    %v2007 = vcvt.f32.s32 %v2004
    %v2008 = vcvt.f32.s32 %v2006
    %v2009 = vshll.u32 %v2008, 16
    %v2010 = vadd.s32 %v2009, %v2007
    %v2011 = vrot.slane %v2010, 4
    %v2012 = vadd.s32 %v2010, %v2011
    %v2013 = vrot.slane %v2012, 2
    %v2014 = vadd.s32 %v2012, %v2013
    %v2015 = vrot.slane %v2014, 1
    %v2016 = vadd.s32 %v2014, %v2015
    %s2017 = vtos %v2016
    %vm2018 = vcmp.eq.s32.totalorder %v53, 4294967295
    %v2019 = vstv %s2017
    %v2020 = vsel %vm2018, %v2019, %v1994
    %vm2022 = vcmp.eq.s32.totalorder %v53, 126
    %v2023 = vsel %vm2022, %v2019, %v2020
    %vm2024 = vcmp.eq.s32.totalorder %v53, 127
    %v2025 = vsel %vm2024, %v1794, %v2023
    %2026 = vst [vmem:[#allocation9] sm:$0x1] %v2025
    // Predicated region
    $region22: #{tpu_custom_call.1} parent=1 // pred_check
      _
    $region23: #{tpu_custom_call.1} parent=1 // pred_check_branch
      %2028 = sbr.rel (0) target = $region25
    $region24: #{tpu_custom_call.1} parent=1 // pred_region
      %s2030 = ssub.s32 16, 16
      %2031 = vsyncadd [#allocation8], %s2030
      %s2033 = sshll.u32 [#allocation9], 4
      %s2034 = int_to_ptr.vmem [resolvable:$true] %s2033
      %2036 = dma.vmem_to_hbm [thread:$0]  %s2034, 16, %s4, [#allocation8]
    $region25: #{tpu_custom_call.1} parent=1 // pred_fallthru
      _
    // Predicated region
    $region26: #{tpu_custom_call.1} parent=1 // pred_check
      _
    $region27: #{tpu_custom_call.1} parent=1 // pred_check_branch
      %2038 = sbr.rel (0) target = $region29
    $region28: #{tpu_custom_call.1} parent=1 // pred_region
      %2039 = dma.done [#allocation8], 16
    $region29: #{tpu_custom_call.1} parent=1 // pred_fallthru
      _
    %2040 = vsyncpa [#allocation7], 1
    %2041 = vsyncpa [#allocation8], 1

</llo_original>
